<compile_context>
chip_gen: v5e
topology: v5e:2x2
jax: 0.10.0
libtpu: 0.0.40
codegen_flags: <defaults>
</compile_context>

<pallas_src>
import functools
import math

import jax
import jax.numpy as jnp
from jax import lax
from jax.experimental import pallas as pl
from jax.experimental.pallas import tpu as pltpu


# ----------------------------- kernels -------------------------------------


def _layer_norm(x, gamma, beta, eps=1e-5):
    mean = jnp.mean(x, axis=-1, keepdims=True)
    var = jnp.mean(jnp.square(x - mean), axis=-1, keepdims=True)
    return (x - mean) * lax.rsqrt(var + eps) * gamma + beta


def encoder_stack_kernel(x_ref, amask_ref,
                         wqkv_ref, bqkv_ref, wo_ref, bo_ref, g1_ref, be1_ref,
                         wf1_ref, bf1_ref, wf2_ref, bf2_ref, g2_ref, be2_ref,
                         o_ref, *, num_heads):
    """One (batch row, layer) grid step of the RoBERTa encoder.

    Grid = (B, L).  The output block index depends only on the batch coordinate,
    so layer activations stay resident in VMEM across the inner 'arbitrary'
    layer axis; weight blocks are indexed by the layer coordinate and are
    double-buffered, so layer l+1 weights stream from HBM while layer l computes.
    MXU matmuls are bf16 x bf16 -> f32; LayerNorm, softmax and residuals stay f32.
    """
    l = pl.program_id(1)

    # At the first layer, seed the resident activation block with the embeddings.
    @pl.when(l == 0)
    def _seed():
        o_ref[0] = x_ref[0]

    x = o_ref[0]                         # (S, H) f32 — current layer input
    amask = amask_ref[0]                 # (1, S) f32 additive key mask (precomputed)
    S, H = x.shape
    hd = H // num_heads

    x_bf = x.astype(jnp.bfloat16)

    # ---- fused QKV projection: single (S,H)@(H,3H) MXU matmul ----
    # (1/sqrt(hd) is folded into the Q slice of wqkv/bqkv at init time.)
    qkv = jnp.dot(x_bf, wqkv_ref[0],
                  preferred_element_type=jnp.float32) + bqkv_ref[0]   # (S, 3H) f32

    def heads(sl):  # (S, H) slice -> (nh, S, hd) bf16
        return jnp.transpose(sl.reshape(S, num_heads, hd), (1, 0, 2)).astype(jnp.bfloat16)

    q = heads(qkv[:, :H])
    k = heads(qkv[:, H:2 * H])
    v = heads(qkv[:, 2 * H:])

    # ---- attention: all heads batched (no per-head loop, no K^T materialization) ----
    scores = jnp.einsum('hqd,hkd->hqk', q, k,
                        preferred_element_type=jnp.float32)           # (nh, S, S) f32
    scores = scores + amask[None]                                     # bcast (1, 1, S)
    scores = scores - jnp.max(scores, axis=-1, keepdims=True)
    # TODO(synk): on v6e/v7x do this exp in bf16 (bf16 EUP path); keep f32 on v5e.
    p = jnp.exp(scores)
    denom = jnp.sum(p, axis=-1, keepdims=True)                        # (nh, S, 1) f32

    ctx = jnp.einsum('hqk,hkd->hqd', p.astype(jnp.bfloat16), v,
                     preferred_element_type=jnp.float32)              # (nh, S, hd) f32
    # Normalize the (small) context instead of p: one EUP reciprocal, S*hd muls.
    ctx = ctx * pl.reciprocal(denom, approx=True)

    # ---- output projection: single (S,H)@(H,H) matmul on re-merged heads ----
    ctx2 = jnp.transpose(ctx, (1, 0, 2)).reshape(S, H).astype(jnp.bfloat16)
    attn = jnp.dot(ctx2, wo_ref[0],
                   preferred_element_type=jnp.float32) + bo_ref[0]    # (S, H) f32

    x1 = _layer_norm(x + attn, g1_ref[0], be1_ref[0])

    # ---- FFN ----
    h = jnp.dot(x1.astype(jnp.bfloat16), wf1_ref[0],
                preferred_element_type=jnp.float32) + bf1_ref[0]
    h = jax.nn.gelu(h)   # tanh approximation (HF uses exact erf GELU — minor drift)
    ff = jnp.dot(h.astype(jnp.bfloat16), wf2_ref[0],
                 preferred_element_type=jnp.float32) + bf2_ref[0]
    x2 = _layer_norm(x1 + ff, g2_ref[0], be2_ref[0])

    # TODO(synk): at real RoBERTa sizes (S=512, nh=12) flash-tile this attention
    # over key blocks (online softmax) so the (nh,S,S) scores never materialize.
    o_ref[0] = x2


def head_kernel(cls_ref, wp_ref, bp_ref, w1_ref, b1_ref, w2_ref, b2_ref, o_ref):
    """RoBERTa pooler (tanh) + dropout(identity) + Linear1/ReLU + Linear2/Softmax.

    The class dim of w2/b2 is padded to a multiple of 128 lanes (padded logits
    carry a -1e30 bias so their softmax weight is exactly 0); wrapper slices it.
    """
    cls_bf = cls_ref[...].astype(jnp.bfloat16)                               # (B, H)
    pooled = jnp.tanh(
        jnp.dot(cls_bf, wp_ref[...], preferred_element_type=jnp.float32) + bp_ref[...])
    d = pooled  # nn.Dropout is identity in eval mode
    x = jnp.maximum(
        jnp.dot(d.astype(jnp.bfloat16), w1_ref[...],
                preferred_element_type=jnp.float32) + b1_ref[...], 0.0)
    logits = jnp.dot(x.astype(jnp.bfloat16), w2_ref[...],
                     preferred_element_type=jnp.float32) + b2_ref[...]
    logits = logits - jnp.max(logits, axis=-1, keepdims=True)                # stable
    e = jnp.exp(logits)
    o_ref[...] = e / jnp.sum(e, axis=-1, keepdims=True)   # exact div: tiny tile


# ----------------------------- wrappers ------------------------------------


def _vmem_limit_bytes(stacked, num_layers, S, H, num_heads):
    """Scoped-VMEM request sized from actual per-layer blocks.

    Layer-indexed weights and activation blocks are double-buffered; constant
    weights are not double-counted (there are none).  Capped at 56 MiB to leave
    headroom under v7x's 64 MiB physical VMEM (v5e/v6e have 128 MiB)."""
    per_layer_w = sum((int(a.size) // num_layers) * a.dtype.itemsize
                      for a in stacked.values())
    ffn = stacked["wf1"].shape[-1]
    nh = num_heads
    act = 2 * (2 * S * H + S) * 4                        # x, out, amask (f32), 2-buffered
    inter = nh * S * S * 6 + 3 * S * H * 4 + 2 * S * H * 4 + S * ffn * 6
    req = 2 * per_layer_w + act + inter + (4 << 20)
    return int(min(max(req, 32 << 20), 56 << 20))


def roberta_encoder(x, amask, stacked, num_heads):
    """Runs all encoder layers in one pallas_call with grid=(batch, layer)."""
    B, S, H = x.shape
    names = ("wqkv", "bqkv", "wo", "bo", "g1", "be1",
             "wf1", "bf1", "wf2", "bf2", "g2", "be2")
    weights = [stacked[n] for n in names]
    L = weights[0].shape[0]

    def wspec(arr):
        # One layer's slab per grid step; index depends only on the layer axis,
        # so default double-buffering prefetches layer l+1 while layer l computes.
        return pl.BlockSpec((1,) + arr.shape[1:], lambda b, l: (l, 0, 0))

    in_specs = [pl.BlockSpec((1, S, H), lambda b, l: (b, 0, 0)),   # embeddings
                pl.BlockSpec((1, 1, S), lambda b, l: (b, 0, 0))]   # additive mask
    in_specs += [wspec(w) for w in weights]

    # TODO(synk): on v5e/v6e (128 MiB VMEM) process Bb=2-4 batch rows per grid
    # step (block (Bb,S,H)) to raise matmul M and amortize per-step overhead.
    return pl.pallas_call(
        functools.partial(encoder_stack_kernel, num_heads=num_heads),
        out_shape=jax.ShapeDtypeStruct((B, S, H), jnp.float32),
        grid=(B, L),
        in_specs=in_specs,
        # Output block index depends only on b -> activations stay VMEM-resident
        # across the whole layer stack (no per-layer HBM round trip).
        out_specs=pl.BlockSpec((1, S, H), lambda b, l: (b, 0, 0)),
        compiler_params=pltpu.CompilerParams(
            # TODO(synk): on v7x use pltpu.CORE_PARALLEL on the batch axis (or a
            # pl.core_map TC mesh) to actually shard batches across the 2 cores.
            dimension_semantics=("parallel", "arbitrary"),
            vmem_limit_bytes=_vmem_limit_bytes(stacked, L, S, H, num_heads),
        ),
    )(x, amask, *weights)


def classification_head(cls_h, wp, bp, w1, b1, w2, b2):
    B = cls_h.shape[0]
    CPAD = w2.shape[1]
    # Single un-gridded pallas_call: whole (tiny) arrays resident in VMEM.
    # TODO(synk): at production scale fold this head into the last encoder grid
    # step (or leave to plain XLA) to remove the fixed pallas_call overhead.
    return pl.pallas_call(
        head_kernel,
        out_shape=jax.ShapeDtypeStruct((B, CPAD), jnp.float32),
    )(cls_h, wp, bp, w1, b1, w2, b2)


def roberta_aggression_forward(tokens, masks, params):
    """Full forward pass of the module."""
    # --- glue: embedding lookup + embedding LayerNorm (plain JAX) ---
    # TODO(synk): token-type embeddings and RoBERTa's padding-offset position ids
    # are omitted (random-init simplified encoder, not the HF checkpoint).
    B, S = tokens.shape
    x = params["word_emb"][tokens] + params["pos_emb"][None, :S, :]
    mean = jnp.mean(x, axis=-1, keepdims=True)
    var = jnp.mean(jnp.square(x - mean), axis=-1, keepdims=True)
    x = (x - mean) * lax.rsqrt(var + 1e-5) * params["emb_g"] + params["emb_b"]

    # Additive key-position mask precomputed once (outside the kernel).
    amask = ((1.0 - masks.astype(jnp.float32)) * (-1e9)).reshape(B, 1, S)

    # --- Pallas: all encoder layers in one call ---
    x = roberta_encoder(x, amask, params["stacked"], params["num_heads"])

    # --- Pallas: pooler (tanh(W * CLS)) + dropout + Linear1/ReLU + Linear2/Softmax ---
    cls_h = x[:, 0, :]
    proba_pad = classification_head(
        cls_h,
        params["pool_w"], params["pool_b"],
        params["lin1_w"], params["lin1_b"],
        params["lin2_w"], params["lin2_b"],
    )
    return proba_pad[:, :params["class_num"]]


# ----------------------------- init ----------------------------------------


def init_params(key, vocab, S, H, n_heads, ffn, h2, class_num, n_layers):
    """Builds fused / layer-stacked weight layouts once, at init time."""
    hd = H // n_heads
    scale = 1.0 / math.sqrt(hd)
    keys = iter(jax.random.split(key, 8 * n_layers + 8))

    def w(fan_in, fan_out):
        return (jax.random.normal(next(keys), (fan_in, fan_out), jnp.float32)
                / math.sqrt(fan_in))

    names = ("wqkv", "bqkv", "wo", "bo", "g1", "be1",
             "wf1", "bf1", "wf2", "bf2", "g2", "be2")
    per_layer = {n: [] for n in names}
    for _ in range(n_layers):
        # Fused QKV weight (H, 3H); 1/sqrt(hd) folded into the Q slice so the
        # kernel never multiplies by the softmax scale.  Weights bf16, biases f32.
        wq = w(H, H) * scale
        wk = w(H, H)
        wv = w(H, H)
        per_layer["wqkv"].append(
            jnp.concatenate([wq, wk, wv], axis=1).astype(jnp.bfloat16))
        per_layer["bqkv"].append(jnp.zeros((1, 3 * H), jnp.float32))
        per_layer["wo"].append(w(H, H).astype(jnp.bfloat16))
        per_layer["bo"].append(jnp.zeros((1, H), jnp.float32))
        per_layer["g1"].append(jnp.ones((1, H), jnp.float32))
        per_layer["be1"].append(jnp.zeros((1, H), jnp.float32))
        per_layer["wf1"].append(w(H, ffn).astype(jnp.bfloat16))
        per_layer["bf1"].append(jnp.zeros((1, ffn), jnp.float32))
        per_layer["wf2"].append(w(ffn, H).astype(jnp.bfloat16))
        per_layer["bf2"].append(jnp.zeros((1, H), jnp.float32))
        per_layer["g2"].append(jnp.ones((1, H), jnp.float32))
        per_layer["be2"].append(jnp.zeros((1, H), jnp.float32))

    stacked = {n: jnp.stack(v) for n, v in per_layer.items()}   # leading layer axis

    pool_w = w(H, H).astype(jnp.bfloat16)
    pool_b = jnp.zeros((1, H), jnp.float32)
    lin1_w = w(H, h2).astype(jnp.bfloat16)         # nn.Linear(h1, h2), h1 == H
    lin1_b = jnp.zeros((1, h2), jnp.float32)

    # nn.Linear(h2, class_num): pad the class dim to a multiple of 128 lanes so
    # the head kernel's output store is full-width; padded logits get a -1e30
    # bias so their softmax weight is exactly 0 (wrapper slices back).
    cpad = ((class_num + 127) // 128) * 128
    w2 = w(h2, class_num)
    lin2_w = (jnp.zeros((h2, cpad), jnp.float32)
              .at[:, :class_num].set(w2).astype(jnp.bfloat16))
    lin2_b = jnp.full((1, cpad), -1e30, jnp.float32).at[:, :class_num].set(0.0)

    return {
        "word_emb": 0.02 * jax.random.normal(next(keys), (vocab, H), jnp.float32),
        "pos_emb": 0.02 * jax.random.normal(next(keys), (S, H), jnp.float32),
        "emb_g": jnp.ones((1, H), jnp.float32),
        "emb_b": jnp.zeros((1, H), jnp.float32),
        "stacked": stacked,
        "num_heads": n_heads,
        "class_num": class_num,
        "pool_w": pool_w, "pool_b": pool_b,
        "lin1_w": lin1_w, "lin1_b": lin1_b,
        "lin2_w": lin2_w, "lin2_b": lin2_b,
    }


# ----------------------------- main -----------------------------------------

if __name__ == "__main__":
    B, S, H = 2, 8, 32          # batch, seq, hidden (h1 == H)
    N_HEADS, FFN = 4, 64
    H2, CLASS_NUM = 16, 4
    VOCAB = 100
    N_LAYERS = 2
    # drop_out_rate is unused at inference (eval mode -> identity dropout)

    key = jax.random.PRNGKey(0)
    kp, kt = jax.random.split(key)
    params = init_params(kp, VOCAB, S, H, N_HEADS, FFN, H2, CLASS_NUM, N_LAYERS)

    tokens = jax.random.randint(kt, (B, S), 0, VOCAB, dtype=jnp.int32)
    masks = jnp.ones((B, S), jnp.int32).at[1, 6:].set(0)   # second sequence padded

    proba = roberta_aggression_forward(tokens, masks, params)
    proba = jax.block_until_ready(proba)

    assert proba.shape == (B, CLASS_NUM)
    assert bool(jnp.all(jnp.abs(jnp.sum(proba, axis=-1) - 1.0) < 1e-5))
    print("KERNEL_OK")
</pallas_src>

<mosaic_0001>
module attributes {stable_mosaic.version = 11 : i64} {
  func.func @encoder_stack_kernel(%arg0: i32, %arg1: i32, %arg2: memref<1x8x32xf32, #tpu.memory_space<vmem>>, %arg3: memref<1x1x8xf32, #tpu.memory_space<vmem>>, %arg4: memref<1x32x96xbf16, #tpu.memory_space<vmem>>, %arg5: memref<1x1x96xf32, #tpu.memory_space<vmem>>, %arg6: memref<1x32x32xbf16, #tpu.memory_space<vmem>>, %arg7: memref<1x1x32xf32, #tpu.memory_space<vmem>>, %arg8: memref<1x1x32xf32, #tpu.memory_space<vmem>>, %arg9: memref<1x1x32xf32, #tpu.memory_space<vmem>>, %arg10: memref<1x32x64xbf16, #tpu.memory_space<vmem>>, %arg11: memref<1x1x64xf32, #tpu.memory_space<vmem>>, %arg12: memref<1x64x32xbf16, #tpu.memory_space<vmem>>, %arg13: memref<1x1x32xf32, #tpu.memory_space<vmem>>, %arg14: memref<1x1x32xf32, #tpu.memory_space<vmem>>, %arg15: memref<1x1x32xf32, #tpu.memory_space<vmem>>, %arg16: memref<1x8x32xf32, #tpu.memory_space<vmem>>) attributes {dimension_semantics = [#tpu.dimension_semantics<parallel>, #tpu.dimension_semantics<arbitrary>], iteration_bounds = array<i64: 2, 2>, scalar_prefetch = 0 : i64, scratch_operands = 0 : i64, tpu.core_type = #tpu.core_type<tc>, window_params = [{transform_indices = @transform_0, window_bounds = array<i64: 1, 8, 32>}, {transform_indices = @transform_1, window_bounds = array<i64: 1, 1, 8>}, {transform_indices = @transform_2, window_bounds = array<i64: 1, 32, 96>}, {transform_indices = @transform_3, window_bounds = array<i64: 1, 1, 96>}, {transform_indices = @transform_4, window_bounds = array<i64: 1, 32, 32>}, {transform_indices = @transform_5, window_bounds = array<i64: 1, 1, 32>}, {transform_indices = @transform_6, window_bounds = array<i64: 1, 1, 32>}, {transform_indices = @transform_7, window_bounds = array<i64: 1, 1, 32>}, {transform_indices = @transform_8, window_bounds = array<i64: 1, 32, 64>}, {transform_indices = @transform_9, window_bounds = array<i64: 1, 1, 64>}, {transform_indices = @transform_10, window_bounds = array<i64: 1, 64, 32>}, {transform_indices = @transform_11, window_bounds = array<i64: 1, 1, 32>}, {transform_indices = @transform_12, window_bounds = array<i64: 1, 1, 32>}, {transform_indices = @transform_13, window_bounds = array<i64: 1, 1, 32>}, {transform_indices = @transform_14, window_bounds = array<i64: 1, 8, 32>}]} {
    %c0_i32 = arith.constant 0 : i32
    %0 = arith.cmpi eq, %arg1, %c0_i32 : i32
    %1 = arith.extui %0 : i1 to i32
    %c0_i32_0 = arith.constant 0 : i32
    %2 = arith.cmpi ne, %1, %c0_i32_0 : i32
    scf.if %2 {
      %c0_66 = arith.constant 0 : index
      %c0_67 = arith.constant 0 : index
      %c0_68 = arith.constant 0 : index
      %139 = vector.load %arg2[%c0_66, %c0_67, %c0_68] : memref<1x8x32xf32, #tpu.memory_space<vmem>>, vector<1x8x32xf32>
      %140 = vector.shape_cast %139 : vector<1x8x32xf32> to vector<8x32xf32>
      %c0_69 = arith.constant 0 : index
      %c0_70 = arith.constant 0 : index
      %c0_71 = arith.constant 0 : index
      %141 = vector.load %arg16[%c0_69, %c0_70, %c0_71] : memref<1x8x32xf32, #tpu.memory_space<vmem>>, vector<1x8x32xf32>
      %142 = vector.shape_cast %141 : vector<1x8x32xf32> to vector<8x32xf32>
      %143 = vector.shape_cast %140 : vector<8x32xf32> to vector<1x8x32xf32>
      tpu.vector_store %arg16[%c0_69, %c0_70, %c0_71], %143 {strides = array<i32>} : memref<1x8x32xf32, #tpu.memory_space<vmem>>, vector<1x8x32xf32>,
    } else {
    }
    %c0 = arith.constant 0 : index
    %c0_1 = arith.constant 0 : index
    %c0_2 = arith.constant 0 : index
    %3 = vector.load %arg16[%c0, %c0_1, %c0_2] : memref<1x8x32xf32, #tpu.memory_space<vmem>>, vector<1x8x32xf32>
    %4 = vector.shape_cast %3 : vector<1x8x32xf32> to vector<8x32xf32>
    %c0_3 = arith.constant 0 : index
    %c0_4 = arith.constant 0 : index
    %c0_5 = arith.constant 0 : index
    %5 = vector.load %arg3[%c0_3, %c0_4, %c0_5] : memref<1x1x8xf32, #tpu.memory_space<vmem>>, vector<1x1x8xf32>
    %6 = vector.shape_cast %5 : vector<1x1x8xf32> to vector<1x8xf32>
    %7 = arith.truncf %4 : vector<8x32xf32> to vector<8x32xbf16>
    %c0_6 = arith.constant 0 : index
    %c0_7 = arith.constant 0 : index
    %c0_8 = arith.constant 0 : index
    %8 = vector.load %arg4[%c0_6, %c0_7, %c0_8] : memref<1x32x96xbf16, #tpu.memory_space<vmem>>, vector<1x32x96xbf16>
    %9 = vector.shape_cast %8 : vector<1x32x96xbf16> to vector<32x96xbf16>
    %cst = arith.constant dense<0.000000e+00> : vector<8x96xf32>
    %10 = tpu.matmul %7, %9, %cst {dimension_numbers = #tpu.dot_dimension_numbers<[1], [0], [0], [1], [0, 0, 1, 1], [], []>} : vector<8x32xbf16>, vector<32x96xbf16>, vector<8x96xf32> -> vector<8x96xf32>
    %c0_9 = arith.constant 0 : index
    %c0_10 = arith.constant 0 : index
    %c0_11 = arith.constant 0 : index
    %11 = vector.load %arg5[%c0_9, %c0_10, %c0_11] : memref<1x1x96xf32, #tpu.memory_space<vmem>>, vector<1x1x96xf32>
    %12 = vector.shape_cast %11 : vector<1x1x96xf32> to vector<1x96xf32>
    %13 = vector.broadcast %12 : vector<1x96xf32> to vector<8x96xf32>
    %14 = arith.addf %10, %13 : vector<8x96xf32>
    %15 = vector.extract_strided_slice %14 {offsets = [0, 0], sizes = [8, 32], strides = [1, 1]} : vector<8x96xf32> to vector<8x32xf32>
    %16 = vector.shape_cast %15 : vector<8x32xf32> to vector<8x4x8xf32>
    %17 = tpu.transpose %16, [1, 0, 2] : vector<8x4x8xf32> -> vector<4x8x8xf32>
    %18 = arith.truncf %17 : vector<4x8x8xf32> to vector<4x8x8xbf16>
    %19 = vector.extract_strided_slice %14 {offsets = [0, 32], sizes = [8, 32], strides = [1, 1]} : vector<8x96xf32> to vector<8x32xf32>
    %20 = vector.shape_cast %19 : vector<8x32xf32> to vector<8x4x8xf32>
    %21 = tpu.transpose %20, [1, 0, 2] : vector<8x4x8xf32> -> vector<4x8x8xf32>
    %22 = arith.truncf %21 : vector<4x8x8xf32> to vector<4x8x8xbf16>
    %23 = vector.extract_strided_slice %14 {offsets = [0, 64], sizes = [8, 32], strides = [1, 1]} : vector<8x96xf32> to vector<8x32xf32>
    %24 = vector.shape_cast %23 : vector<8x32xf32> to vector<8x4x8xf32>
    %25 = tpu.transpose %24, [1, 0, 2] : vector<8x4x8xf32> -> vector<4x8x8xf32>
    %26 = arith.truncf %25 : vector<4x8x8xf32> to vector<4x8x8xbf16>
    "tpu.trace_start"() <{level = 10 : i32, message = "hqd,hkd->hqk"}> : () -> ()
    %cst_12 = arith.constant dense<0.000000e+00> : vector<4x8x8xf32>
    %27 = tpu.matmul %18, %22, %cst_12 {dimension_numbers = #tpu.dot_dimension_numbers<[2], [2], [1], [1], [0, 0, 0, 1, 1, 1], [0], [0]>} : vector<4x8x8xbf16>, vector<4x8x8xbf16>, vector<4x8x8xf32> -> vector<4x8x8xf32>
    "tpu.trace_stop"() : () -> ()
    %28 = vector.shape_cast %6 : vector<1x8xf32> to vector<1x1x8xf32>
    %29 = vector.broadcast %28 : vector<1x1x8xf32> to vector<4x8x8xf32>
    %30 = arith.addf %27, %29 : vector<4x8x8xf32>
    %cst_13 = arith.constant dense<0xFF800000> : vector<4x8xf32>
    %31 = vector.multi_reduction <maximumf>, %30, %cst_13 [2] : vector<4x8x8xf32> to vector<4x8xf32>
    %32 = vector.shape_cast %31 : vector<4x8xf32> to vector<4x8x1xf32>
    %33 = vector.broadcast %32 : vector<4x8x1xf32> to vector<4x8x8xf32>
    %34 = arith.subf %30, %33 : vector<4x8x8xf32>
    %35 = math.exp %34 : vector<4x8x8xf32>
    %cst_14 = arith.constant dense<0.000000e+00> : vector<4x8xf32>
    %36 = vector.multi_reduction <add>, %35, %cst_14 [2] : vector<4x8x8xf32> to vector<4x8xf32>
    %37 = vector.shape_cast %36 : vector<4x8xf32> to vector<4x8x1xf32>
    %38 = arith.truncf %35 : vector<4x8x8xf32> to vector<4x8x8xbf16>
    "tpu.trace_start"() <{level = 10 : i32, message = "hqk,hkd->hqd"}> : () -> ()
    %cst_15 = arith.constant dense<0.000000e+00> : vector<4x8x8xf32>
    %39 = tpu.matmul %38, %26, %cst_15 {dimension_numbers = #tpu.dot_dimension_numbers<[2], [1], [1], [2], [0, 0, 0, 1, 1, 2], [0], [0]>} : vector<4x8x8xbf16>, vector<4x8x8xbf16>, vector<4x8x8xf32> -> vector<4x8x8xf32>
    "tpu.trace_stop"() : () -> ()
    %40 = tpu.reciprocal %37 {approx = true} : vector<4x8x1xf32> -> vector<4x8x1xf32>
    %41 = vector.broadcast %40 : vector<4x8x1xf32> to vector<4x8x8xf32>
    %42 = arith.mulf %39, %41 : vector<4x8x8xf32>
    %43 = tpu.transpose %42, [1, 0, 2] : vector<4x8x8xf32> -> vector<8x4x8xf32>
    %44 = vector.shape_cast %43 : vector<8x4x8xf32> to vector<8x32xf32>
    %45 = arith.truncf %44 : vector<8x32xf32> to vector<8x32xbf16>
    %c0_16 = arith.constant 0 : index
    %c0_17 = arith.constant 0 : index
    %c0_18 = arith.constant 0 : index
    %46 = vector.load %arg6[%c0_16, %c0_17, %c0_18] : memref<1x32x32xbf16, #tpu.memory_space<vmem>>, vector<1x32x32xbf16>
    %47 = vector.shape_cast %46 : vector<1x32x32xbf16> to vector<32x32xbf16>
    %cst_19 = arith.constant dense<0.000000e+00> : vector<8x32xf32>
    %48 = tpu.matmul %45, %47, %cst_19 {dimension_numbers = #tpu.dot_dimension_numbers<[1], [0], [0], [1], [0, 0, 1, 1], [], []>} : vector<8x32xbf16>, vector<32x32xbf16>, vector<8x32xf32> -> vector<8x32xf32>
    %c0_20 = arith.constant 0 : index
    %c0_21 = arith.constant 0 : index
    %c0_22 = arith.constant 0 : index
    %49 = vector.load %arg7[%c0_20, %c0_21, %c0_22] : memref<1x1x32xf32, #tpu.memory_space<vmem>>, vector<1x1x32xf32>
    %50 = vector.shape_cast %49 : vector<1x1x32xf32> to vector<1x32xf32>
    %51 = vector.broadcast %50 : vector<1x32xf32> to vector<8x32xf32>
    %52 = arith.addf %48, %51 : vector<8x32xf32>
    %53 = arith.addf %4, %52 : vector<8x32xf32>
    %c0_23 = arith.constant 0 : index
    %c0_24 = arith.constant 0 : index
    %c0_25 = arith.constant 0 : index
    %54 = vector.load %arg8[%c0_23, %c0_24, %c0_25] : memref<1x1x32xf32, #tpu.memory_space<vmem>>, vector<1x1x32xf32>
    %55 = vector.shape_cast %54 : vector<1x1x32xf32> to vector<1x32xf32>
    %c0_26 = arith.constant 0 : index
    %c0_27 = arith.constant 0 : index
    %c0_28 = arith.constant 0 : index
    %56 = vector.load %arg9[%c0_26, %c0_27, %c0_28] : memref<1x1x32xf32, #tpu.memory_space<vmem>>, vector<1x1x32xf32>
    %57 = vector.shape_cast %56 : vector<1x1x32xf32> to vector<1x32xf32>
    %cst_29 = arith.constant dense<0.000000e+00> : vector<8xf32>
    %58 = vector.multi_reduction <add>, %53, %cst_29 [1] : vector<8x32xf32> to vector<8xf32>
    %59 = vector.shape_cast %58 : vector<8xf32> to vector<8x1xf32>
    %cst_30 = arith.constant 3.200000e+01 : f32
    %60 = vector.broadcast %cst_30 : f32 to vector<8x1xf32>
    %61 = arith.divf %59, %60 : vector<8x1xf32>
    %62 = vector.broadcast %61 : vector<8x1xf32> to vector<8x32xf32>
    %63 = arith.subf %53, %62 : vector<8x32xf32>
    %64 = arith.mulf %63, %63 : vector<8x32xf32>
    %cst_31 = arith.constant dense<0.000000e+00> : vector<8xf32>
    %65 = vector.multi_reduction <add>, %64, %cst_31 [1] : vector<8x32xf32> to vector<8xf32>
    %66 = vector.shape_cast %65 : vector<8xf32> to vector<8x1xf32>
    %cst_32 = arith.constant 3.200000e+01 : f32
    %67 = vector.broadcast %cst_32 : f32 to vector<8x1xf32>
    %68 = arith.divf %66, %67 : vector<8x1xf32>
    %69 = vector.broadcast %61 : vector<8x1xf32> to vector<8x32xf32>
    %70 = arith.subf %53, %69 : vector<8x32xf32>
    %cst_33 = arith.constant 9.99999974E-6 : f32
    %71 = vector.broadcast %cst_33 : f32 to vector<8x1xf32>
    %72 = arith.addf %68, %71 : vector<8x1xf32>
    %73 = math.rsqrt %72 : vector<8x1xf32>
    %74 = vector.broadcast %73 : vector<8x1xf32> to vector<8x32xf32>
    %75 = arith.mulf %70, %74 : vector<8x32xf32>
    %76 = vector.broadcast %55 : vector<1x32xf32> to vector<8x32xf32>
    %77 = arith.mulf %75, %76 : vector<8x32xf32>
    %78 = vector.broadcast %57 : vector<1x32xf32> to vector<8x32xf32>
    %79 = arith.addf %77, %78 : vector<8x32xf32>
    %80 = arith.truncf %79 : vector<8x32xf32> to vector<8x32xbf16>
    %c0_34 = arith.constant 0 : index
    %c0_35 = arith.constant 0 : index
    %c0_36 = arith.constant 0 : index
    %81 = vector.load %arg10[%c0_34, %c0_35, %c0_36] : memref<1x32x64xbf16, #tpu.memory_space<vmem>>, vector<1x32x64xbf16>
    %82 = vector.shape_cast %81 : vector<1x32x64xbf16> to vector<32x64xbf16>
    %cst_37 = arith.constant dense<0.000000e+00> : vector<8x64xf32>
    %83 = tpu.matmul %80, %82, %cst_37 {dimension_numbers = #tpu.dot_dimension_numbers<[1], [0], [0], [1], [0, 0, 1, 1], [], []>} : vector<8x32xbf16>, vector<32x64xbf16>, vector<8x64xf32> -> vector<8x64xf32>
    %c0_38 = arith.constant 0 : index
    %c0_39 = arith.constant 0 : index
    %c0_40 = arith.constant 0 : index
    %84 = vector.load %arg11[%c0_38, %c0_39, %c0_40] : memref<1x1x64xf32, #tpu.memory_space<vmem>>, vector<1x1x64xf32>
    %85 = vector.shape_cast %84 : vector<1x1x64xf32> to vector<1x64xf32>
    %86 = vector.broadcast %85 : vector<1x64xf32> to vector<8x64xf32>
    %87 = arith.addf %83, %86 : vector<8x64xf32>
    %88 = arith.mulf %87, %87 : vector<8x64xf32>
    %89 = arith.mulf %87, %88 : vector<8x64xf32>
    %cst_41 = arith.constant 4.471500e-02 : f32
    %90 = vector.broadcast %cst_41 : f32 to vector<8x64xf32>
    %91 = arith.mulf %90, %89 : vector<8x64xf32>
    %92 = arith.addf %87, %91 : vector<8x64xf32>
    %cst_42 = arith.constant 0.797884583 : f32
    %93 = vector.broadcast %cst_42 : f32 to vector<8x64xf32>
    %94 = arith.mulf %93, %92 : vector<8x64xf32>
    %95 = math.tanh %94 : vector<8x64xf32>
    %cst_43 = arith.constant 1.000000e+00 : f32
    %96 = vector.broadcast %cst_43 : f32 to vector<8x64xf32>
    %97 = arith.addf %96, %95 : vector<8x64xf32>
    %cst_44 = arith.constant 5.000000e-01 : f32
    %98 = vector.broadcast %cst_44 : f32 to vector<8x64xf32>
    %99 = arith.mulf %98, %97 : vector<8x64xf32>
    %100 = arith.mulf %87, %99 : vector<8x64xf32>
    %101 = arith.truncf %100 : vector<8x64xf32> to vector<8x64xbf16>
    %c0_45 = arith.constant 0 : index
    %c0_46 = arith.constant 0 : index
    %c0_47 = arith.constant 0 : index
    %102 = vector.load %arg12[%c0_45, %c0_46, %c0_47] : memref<1x64x32xbf16, #tpu.memory_space<vmem>>, vector<1x64x32xbf16>
    %103 = vector.shape_cast %102 : vector<1x64x32xbf16> to vector<64x32xbf16>
    %cst_48 = arith.constant dense<0.000000e+00> : vector<8x32xf32>
    %104 = tpu.matmul %101, %103, %cst_48 {dimension_numbers = #tpu.dot_dimension_numbers<[1], [0], [0], [1], [0, 0, 1, 1], [], []>} : vector<8x64xbf16>, vector<64x32xbf16>, vector<8x32xf32> -> vector<8x32xf32>
    %c0_49 = arith.constant 0 : index
    %c0_50 = arith.constant 0 : index
    %c0_51 = arith.constant 0 : index
    %105 = vector.load %arg13[%c0_49, %c0_50, %c0_51] : memref<1x1x32xf32, #tpu.memory_space<vmem>>, vector<1x1x32xf32>
    %106 = vector.shape_cast %105 : vector<1x1x32xf32> to vector<1x32xf32>
    %107 = vector.broadcast %106 : vector<1x32xf32> to vector<8x32xf32>
    %108 = arith.addf %104, %107 : vector<8x32xf32>
    %109 = arith.addf %79, %108 : vector<8x32xf32>
    %c0_52 = arith.constant 0 : index
    %c0_53 = arith.constant 0 : index
    %c0_54 = arith.constant 0 : index
    %110 = vector.load %arg14[%c0_52, %c0_53, %c0_54] : memref<1x1x32xf32, #tpu.memory_space<vmem>>, vector<1x1x32xf32>
    %111 = vector.shape_cast %110 : vector<1x1x32xf32> to vector<1x32xf32>
    %c0_55 = arith.constant 0 : index
    %c0_56 = arith.constant 0 : index
    %c0_57 = arith.constant 0 : index
    %112 = vector.load %arg15[%c0_55, %c0_56, %c0_57] : memref<1x1x32xf32, #tpu.memory_space<vmem>>, vector<1x1x32xf32>
    %113 = vector.shape_cast %112 : vector<1x1x32xf32> to vector<1x32xf32>
    %cst_58 = arith.constant dense<0.000000e+00> : vector<8xf32>
    %114 = vector.multi_reduction <add>, %109, %cst_58 [1] : vector<8x32xf32> to vector<8xf32>
    %115 = vector.shape_cast %114 : vector<8xf32> to vector<8x1xf32>
    %cst_59 = arith.constant 3.200000e+01 : f32
    %116 = vector.broadcast %cst_59 : f32 to vector<8x1xf32>
    %117 = arith.divf %115, %116 : vector<8x1xf32>
    %118 = vector.broadcast %117 : vector<8x1xf32> to vector<8x32xf32>
    %119 = arith.subf %109, %118 : vector<8x32xf32>
    %120 = arith.mulf %119, %119 : vector<8x32xf32>
    %cst_60 = arith.constant dense<0.000000e+00> : vector<8xf32>
    %121 = vector.multi_reduction <add>, %120, %cst_60 [1] : vector<8x32xf32> to vector<8xf32>
    %122 = vector.shape_cast %121 : vector<8xf32> to vector<8x1xf32>
    %cst_61 = arith.constant 3.200000e+01 : f32
    %123 = vector.broadcast %cst_61 : f32 to vector<8x1xf32>
    %124 = arith.divf %122, %123 : vector<8x1xf32>
    %125 = vector.broadcast %117 : vector<8x1xf32> to vector<8x32xf32>
    %126 = arith.subf %109, %125 : vector<8x32xf32>
    %cst_62 = arith.constant 9.99999974E-6 : f32
    %127 = vector.broadcast %cst_62 : f32 to vector<8x1xf32>
    %128 = arith.addf %124, %127 : vector<8x1xf32>
    %129 = math.rsqrt %128 : vector<8x1xf32>
    %130 = vector.broadcast %129 : vector<8x1xf32> to vector<8x32xf32>
    %131 = arith.mulf %126, %130 : vector<8x32xf32>
    %132 = vector.broadcast %111 : vector<1x32xf32> to vector<8x32xf32>
    %133 = arith.mulf %131, %132 : vector<8x32xf32>
    %134 = vector.broadcast %113 : vector<1x32xf32> to vector<8x32xf32>
    %135 = arith.addf %133, %134 : vector<8x32xf32>
    %c0_63 = arith.constant 0 : index
    %c0_64 = arith.constant 0 : index
    %c0_65 = arith.constant 0 : index
    %136 = vector.load %arg16[%c0_63, %c0_64, %c0_65] : memref<1x8x32xf32, #tpu.memory_space<vmem>>, vector<1x8x32xf32>
    %137 = vector.shape_cast %136 : vector<1x8x32xf32> to vector<8x32xf32>
    %138 = vector.shape_cast %135 : vector<8x32xf32> to vector<1x8x32xf32>
    tpu.vector_store %arg16[%c0_63, %c0_64, %c0_65], %138 {strides = array<i32>} : memref<1x8x32xf32, #tpu.memory_space<vmem>>, vector<1x8x32xf32>,
    return
  }
  func.func @transform_0(%arg0: i32, %arg1: i32) -> (i32, i32, i32) {
    %c0_i32 = arith.constant 0 : i32
    %c0_i32_0 = arith.constant 0 : i32
    %c0_i32_1 = arith.constant 0 : i32
    return %arg0, %c0_i32, %c0_i32_0 : i32, i32, i32
  }
  func.func @transform_1(%arg0: i32, %arg1: i32) -> (i32, i32, i32) {
    %c0_i32 = arith.constant 0 : i32
    %c0_i32_0 = arith.constant 0 : i32
    %c0_i32_1 = arith.constant 0 : i32
    return %arg0, %c0_i32, %c0_i32_0 : i32, i32, i32
  }
  func.func @transform_2(%arg0: i32, %arg1: i32) -> (i32, i32, i32) {
    %c0_i32 = arith.constant 0 : i32
    %c0_i32_0 = arith.constant 0 : i32
    %c0_i32_1 = arith.constant 0 : i32
    return %arg1, %c0_i32, %c0_i32_0 : i32, i32, i32
  }
  func.func @transform_3(%arg0: i32, %arg1: i32) -> (i32, i32, i32) {
    %c0_i32 = arith.constant 0 : i32
    %c0_i32_0 = arith.constant 0 : i32
    %c0_i32_1 = arith.constant 0 : i32
    return %arg1, %c0_i32, %c0_i32_0 : i32, i32, i32
  }
  func.func @transform_4(%arg0: i32, %arg1: i32) -> (i32, i32, i32) {
    %c0_i32 = arith.constant 0 : i32
    %c0_i32_0 = arith.constant 0 : i32
    %c0_i32_1 = arith.constant 0 : i32
    return %arg1, %c0_i32, %c0_i32_0 : i32, i32, i32
  }
  func.func @transform_5(%arg0: i32, %arg1: i32) -> (i32, i32, i32) {
    %c0_i32 = arith.constant 0 : i32
    %c0_i32_0 = arith.constant 0 : i32
    %c0_i32_1 = arith.constant 0 : i32
    return %arg1, %c0_i32, %c0_i32_0 : i32, i32, i32
  }
  func.func @transform_6(%arg0: i32, %arg1: i32) -> (i32, i32, i32) {
    %c0_i32 = arith.constant 0 : i32
    %c0_i32_0 = arith.constant 0 : i32
    %c0_i32_1 = arith.constant 0 : i32
    return %arg1, %c0_i32, %c0_i32_0 : i32, i32, i32
  }
  func.func @transform_7(%arg0: i32, %arg1: i32) -> (i32, i32, i32) {
    %c0_i32 = arith.constant 0 : i32
    %c0_i32_0 = arith.constant 0 : i32
    %c0_i32_1 = arith.constant 0 : i32
    return %arg1, %c0_i32, %c0_i32_0 : i32, i32, i32
  }
  func.func @transform_8(%arg0: i32, %arg1: i32) -> (i32, i32, i32) {
    %c0_i32 = arith.constant 0 : i32
    %c0_i32_0 = arith.constant 0 : i32
    %c0_i32_1 = arith.constant 0 : i32
    return %arg1, %c0_i32, %c0_i32_0 : i32, i32, i32
  }
  func.func @transform_9(%arg0: i32, %arg1: i32) -> (i32, i32, i32) {
    %c0_i32 = arith.constant 0 : i32
    %c0_i32_0 = arith.constant 0 : i32
    %c0_i32_1 = arith.constant 0 : i32
    return %arg1, %c0_i32, %c0_i32_0 : i32, i32, i32
  }
  func.func @transform_10(%arg0: i32, %arg1: i32) -> (i32, i32, i32) {
    %c0_i32 = arith.constant 0 : i32
    %c0_i32_0 = arith.constant 0 : i32
    %c0_i32_1 = arith.constant 0 : i32
    return %arg1, %c0_i32, %c0_i32_0 : i32, i32, i32
  }
  func.func @transform_11(%arg0: i32, %arg1: i32) -> (i32, i32, i32) {
    %c0_i32 = arith.constant 0 : i32
    %c0_i32_0 = arith.constant 0 : i32
    %c0_i32_1 = arith.constant 0 : i32
    return %arg1, %c0_i32, %c0_i32_0 : i32, i32, i32
  }
  func.func @transform_12(%arg0: i32, %arg1: i32) -> (i32, i32, i32) {
    %c0_i32 = arith.constant 0 : i32
    %c0_i32_0 = arith.constant 0 : i32
    %c0_i32_1 = arith.constant 0 : i32
    return %arg1, %c0_i32, %c0_i32_0 : i32, i32, i32
  }
  func.func @transform_13(%arg0: i32, %arg1: i32) -> (i32, i32, i32) {
    %c0_i32 = arith.constant 0 : i32
    %c0_i32_0 = arith.constant 0 : i32
    %c0_i32_1 = arith.constant 0 : i32
    return %arg1, %c0_i32, %c0_i32_0 : i32, i32, i32
  }
  func.func @transform_14(%arg0: i32, %arg1: i32) -> (i32, i32, i32) {
    %c0_i32 = arith.constant 0 : i32
    %c0_i32_0 = arith.constant 0 : i32
    %c0_i32_1 = arith.constant 0 : i32
    return %arg0, %c0_i32, %c0_i32_0 : i32, i32, i32
  }
}

</mosaic_0001>

<llo_original>
// kernel: tpu_custom_call.1
$region0: #{tpu_custom_call.1}
  #allocation0 [shape = 'u32[]', space=smem, size = 0x4, offset = 0x4, fixed_abs, tag = 'smem constant byte address 0x4 - core index']
  #allocation1 [shape = 'u32[72,128]{1,0:T(1,128)}', space=vmem, size = 0x9000, scoped, tag = 'internal scratch']
  %s0 = inlined_call_operand.hbm [shape: f32[2,8,32], index: 0, kind: input, shape index: {}]
  %s1 = inlined_call_operand.hbm [shape: f32[2,1,8], index: 1, kind: input, shape index: {}]
  %s2 = inlined_call_operand.vmem [shape: bf16[2,32,96], index: 2, kind: input, shape index: {}]
  %s3 = inlined_call_operand.hbm [shape: f32[2,1,96], index: 3, kind: input, shape index: {}]
  %s4 = inlined_call_operand.vmem [shape: bf16[2,32,32], index: 4, kind: input, shape index: {}]
  %s5 = inlined_call_operand.vmem [shape: f32[2,1,32], index: 5, kind: input, shape index: {}]
  %s6 = inlined_call_operand.vmem [shape: f32[2,1,32], index: 6, kind: input, shape index: {}]
  %s7 = inlined_call_operand.hbm [shape: f32[2,1,32], index: 7, kind: input, shape index: {}]
  %s8 = inlined_call_operand.vmem [shape: bf16[2,32,64], index: 8, kind: input, shape index: {}]
  %s9 = inlined_call_operand.vmem [shape: f32[2,1,64], index: 9, kind: input, shape index: {}]
  %s10 = inlined_call_operand.vmem [shape: bf16[2,64,32], index: 10, kind: input, shape index: {}]
  %s11 = inlined_call_operand.vmem [shape: f32[2,1,32], index: 11, kind: input, shape index: {}]
  %s12 = inlined_call_operand.vmem [shape: f32[2,1,32], index: 12, kind: input, shape index: {}]
  %s13 = inlined_call_operand.hbm [shape: f32[2,1,32], index: 13, kind: input, shape index: {}]
  %s14 = inlined_call_operand.hbm [shape: f32[2,8,32], index: 14, kind: output, shape index: {}]
  %s15 = sld [smem:[#allocation0]]
  $region113: #{tpu_custom_call.1} parent=0
    _
  %s17 = ssub.s32 1, %s15
  %s18 = scalar_select 0, %s17, %s15
  $region1: #{tpu_custom_call.1} parent=0
    #allocation2 [shape = 'u8[8192]{0}', space=vmem, size = 0x2000, scoped, tag = 'input window, operand 0']
    #allocation3 [shape = 's32[2]{0}', space=sflag, size = 0x8, scoped, tag = 'scoped memory for tpu_custom_call.1']
    #allocation4 [shape = 's32[2]{0}', space=sflag, size = 0x8, scoped, tag = 'scoped memory for tpu_custom_call.1']
    #allocation5 [shape = 'u8[1024]{0}', space=vmem, size = 0x400, scoped, tag = 'input window, operand 1']
    #allocation6 [shape = 's32[2]{0}', space=sflag, size = 0x8, scoped, tag = 'scoped memory for tpu_custom_call.1']
    #allocation7 [shape = 'u8[1024]{0}', space=vmem, size = 0x400, scoped, tag = 'input window, operand 3']
    #allocation8 [shape = 'u8[1024]{0}', space=vmem, size = 0x400, scoped, tag = 'input window, operand 7']
    #allocation9 [shape = 's32[2]{0}', space=sflag, size = 0x8, scoped, tag = 'scoped memory for tpu_custom_call.1']
    #allocation10 [shape = 'u8[1024]{0}', space=vmem, size = 0x400, scoped, tag = 'input window, operand 13']
    #allocation11 [shape = 'u8[8192]{0}', space=vmem, size = 0x2000, scoped, tag = 'output window, operand 0']
    %19 = vsyncpa [#allocation3], 0
    %s20 = scalar_lea.sflag [#allocation3], 1
    %21 = vsyncpa %s20, 0
    %22 = vsyncpa [#allocation6], 0
    %s23 = scalar_lea.sflag [#allocation6], 1
    %24 = vsyncpa %s23, 0
    %25 = vsyncpa [#allocation9], 0
    %s26 = scalar_lea.sflag [#allocation9], 1
    %27 = vsyncpa %s26, 0
    %28 = vsyncpa [#allocation4], 0
    %s29 = scalar_lea.sflag [#allocation4], 1
    %30 = vsyncpa %s29, 0
    loop: start=0, step=1, limit=6
    $region2: #{tpu_custom_call.1} parent=1 // loop_pre_header
      _
    $region3: #{tpu_custom_call.1} parent=1 // loop_header
      %s32 = sphi 0, %s36
      %p33 = scmp.ge.s32.totalorder %s32, 6
      %s39 = sphi 0, %s51
      %s40 = sphi 0, %s47
      %s41 = sphi 0, %s39
      %s42 = sphi 0, %s40
      %s43 = sphi 0, %s41
      %s44 = sphi 0, %s42
      %s54 = sphi 0, %s56
      %s57 = sphi 0, %s54
      %s58 = sphi 0, %s57
      %s74 = sphi 0, %s58
      %s80 = sphi 0, %s82
      %s83 = sphi 0, %s80
      %s84 = sphi 0, %s83
      %s100 = sphi 0, %s84
      %s106 = sphi 0, %s108
      %s109 = sphi 0, %s106
      %s110 = sphi 0, %s109
      %s126 = sphi 0, %s110
      %s132 = sphi 0, %s134
      %s135 = sphi 0, %s132
      %s136 = sphi 0, %s135
      %s152 = sphi 0, %s136
      %s158 = sphi 0, %s160
      %s161 = sphi 0, %s158
      %s162 = sphi 0, %s161
      %s178 = sphi 0, %s162
      %s184 = sphi 0, %s186
      %s187 = sphi 0, %s184
      %s188 = sphi 0, %s187
      %s204 = sphi 0, %s188
      %s210 = sphi 0, %s212
      %s213 = sphi 0, %s210
      %s214 = sphi 0, %s213
      %s230 = sphi 0, %s214
      %s236 = sphi 0, %s238
      %s239 = sphi 0, %s236
      %s240 = sphi 0, %s239
      %s256 = sphi 0, %s240
      %s262 = sphi 0, %s264
      %s265 = sphi 0, %s262
      %s266 = sphi 0, %s265
      %s282 = sphi 0, %s266
      %s288 = sphi 0, %s290
      %s291 = sphi 0, %s288
      %s292 = sphi 0, %s291
      %s308 = sphi 0, %s292
      %s314 = sphi 0, %s316
      %s317 = sphi 0, %s314
      %s318 = sphi 0, %s317
      %s334 = sphi 0, %s318
      %s340 = sphi 0, %s342
      %s343 = sphi 0, %s340
      %s344 = sphi 0, %s343
      %s360 = sphi 0, %s344
      %s366 = sphi 0, %s368
      %s369 = sphi 0, %s366
      %s370 = sphi 0, %s369
      %s386 = sphi 0, %s370
      %s392 = sphi 0, %s394
      %s395 = sphi 0, %s392
      %s396 = sphi 0, %s395
      %s412 = sphi 0, %s396
      %s418 = sphi 0, %s420
      %s421 = sphi 0, %s418
      %s422 = sphi 0, %s421
      %s438 = sphi 0, %s422
    $region4: #{tpu_custom_call.1} parent=1 // loop_header_branch
      %35 = sbr.rel (%p33) target = $region8
    $region5: #{tpu_custom_call.1} parent=1 // loop_body
      %s37 = ssub.s32 %s32, 1
      %s38 = ssub.s32 %s32, 2
      %s45 = sadd.s32 1, %s40
      %p46 = scmp.ge.s32.totalorder %s45, 2
      %s47 = scalar_select %p46, 0, %s45
      %s48 = sadd.s32 1, %s39
      %s49 = scalar_select %p46, %s48, %s39
      %p50 = scmp.ge.s32.totalorder %s49, 2
      %s51 = scalar_select %p50, 0, %s49
      %s52 = ssub.s32 %s39, %s51
      %p53 = scmp.eq.s32.totalorder %s52, 0
      %s55 = sadd.s32 %s54, 1
      %s56 = scalar_select %p53, %s54, %s55
      %p59 = pneg %p53
      %p60 = scmp.eq.s32.totalorder %s32, 3
      %p61 = por %p59, %p60
      %p62 = scmp.ne.s32.totalorder %s54, %s57
      %p63 = scmp.eq.s32.totalorder %s32, 0
      %p64 = por %p62, %p63
      %p65 = scmp.ne.s32.totalorder %s54, %s57
      %p66 = scmp.eq.s32.totalorder %s37, 3
      %p67 = por %p65, %p66
      %p68 = scmp.ne.s32.totalorder %s57, %s58
      %p69 = scmp.eq.s32.totalorder %s37, 0
      %p70 = por %p68, %p69
      %p71 = scmp.ne.s32.totalorder %s57, %s58
      %p72 = scmp.eq.s32.totalorder %s38, 3
      %p73 = por %p71, %p72
      %p75 = scmp.ne.s32.totalorder %s58, %s74
      %p76 = scmp.eq.s32.totalorder %s38, 0
      %p77 = por %p75, %p76
      %s78 = ssub.s32 %s39, %s51
      %p79 = scmp.eq.s32.totalorder %s78, 0
      %s81 = sadd.s32 %s80, 1
      %s82 = scalar_select %p79, %s80, %s81
      %p85 = pneg %p79
      %p86 = scmp.eq.s32.totalorder %s32, 3
      %p87 = por %p85, %p86
      %p88 = scmp.ne.s32.totalorder %s80, %s83
      %p89 = scmp.eq.s32.totalorder %s32, 0
      %p90 = por %p88, %p89
      %p91 = scmp.ne.s32.totalorder %s80, %s83
      %p92 = scmp.eq.s32.totalorder %s37, 3
      %p93 = por %p91, %p92
      %p94 = scmp.ne.s32.totalorder %s83, %s84
      %p95 = scmp.eq.s32.totalorder %s37, 0
      %p96 = por %p94, %p95
      %p97 = scmp.ne.s32.totalorder %s83, %s84
      %p98 = scmp.eq.s32.totalorder %s38, 3
      %p99 = por %p97, %p98
      %p101 = scmp.ne.s32.totalorder %s84, %s100
      %p102 = scmp.eq.s32.totalorder %s38, 0
      %p103 = por %p101, %p102
      %s104 = ssub.s32 %s40, %s47
      %p105 = scmp.eq.s32.totalorder %s104, 0
      %s107 = sadd.s32 %s106, 1
      %s108 = scalar_select %p105, %s106, %s107
      %p111 = pneg %p105
      %p112 = scmp.eq.s32.totalorder %s32, 3
      %p113 = por %p111, %p112
      %p114 = scmp.ne.s32.totalorder %s106, %s109
      %p115 = scmp.eq.s32.totalorder %s32, 0
      %p116 = por %p114, %p115
      %p117 = scmp.ne.s32.totalorder %s106, %s109
      %p118 = scmp.eq.s32.totalorder %s37, 3
      %p119 = por %p117, %p118
      %p120 = scmp.ne.s32.totalorder %s109, %s110
      %p121 = scmp.eq.s32.totalorder %s37, 0
      %p122 = por %p120, %p121
      %p123 = scmp.ne.s32.totalorder %s109, %s110
      %p124 = scmp.eq.s32.totalorder %s38, 3
      %p125 = por %p123, %p124
      %p127 = scmp.ne.s32.totalorder %s110, %s126
      %p128 = scmp.eq.s32.totalorder %s38, 0
      %p129 = por %p127, %p128
      %s130 = ssub.s32 %s40, %s47
      %p131 = scmp.eq.s32.totalorder %s130, 0
      %s133 = sadd.s32 %s132, 1
      %s134 = scalar_select %p131, %s132, %s133
      %p137 = pneg %p131
      %p138 = scmp.eq.s32.totalorder %s32, 3
      %p139 = por %p137, %p138
      %p140 = scmp.ne.s32.totalorder %s132, %s135
      %p141 = scmp.eq.s32.totalorder %s32, 0
      %p142 = por %p140, %p141
      %p143 = scmp.ne.s32.totalorder %s132, %s135
      %p144 = scmp.eq.s32.totalorder %s37, 3
      %p145 = por %p143, %p144
      %p146 = scmp.ne.s32.totalorder %s135, %s136
      %p147 = scmp.eq.s32.totalorder %s37, 0
      %p148 = por %p146, %p147
      %p149 = scmp.ne.s32.totalorder %s135, %s136
      %p150 = scmp.eq.s32.totalorder %s38, 3
      %p151 = por %p149, %p150
      %p153 = scmp.ne.s32.totalorder %s136, %s152
      %p154 = scmp.eq.s32.totalorder %s38, 0
      %p155 = por %p153, %p154
      %s156 = ssub.s32 %s40, %s47
      %p157 = scmp.eq.s32.totalorder %s156, 0
      %s159 = sadd.s32 %s158, 1
      %s160 = scalar_select %p157, %s158, %s159
      %p163 = pneg %p157
      %p164 = scmp.eq.s32.totalorder %s32, 3
      %p165 = por %p163, %p164
      %p166 = scmp.ne.s32.totalorder %s158, %s161
      %p167 = scmp.eq.s32.totalorder %s32, 0
      %p168 = por %p166, %p167
      %p169 = scmp.ne.s32.totalorder %s158, %s161
      %p170 = scmp.eq.s32.totalorder %s37, 3
      %p171 = por %p169, %p170
      %p172 = scmp.ne.s32.totalorder %s161, %s162
      %p173 = scmp.eq.s32.totalorder %s37, 0
      %p174 = por %p172, %p173
      %p175 = scmp.ne.s32.totalorder %s161, %s162
      %p176 = scmp.eq.s32.totalorder %s38, 3
      %p177 = por %p175, %p176
      %p179 = scmp.ne.s32.totalorder %s162, %s178
      %p180 = scmp.eq.s32.totalorder %s38, 0
      %p181 = por %p179, %p180
      %s182 = ssub.s32 %s40, %s47
      %p183 = scmp.eq.s32.totalorder %s182, 0
      %s185 = sadd.s32 %s184, 1
      %s186 = scalar_select %p183, %s184, %s185
      %p189 = pneg %p183
      %p190 = scmp.eq.s32.totalorder %s32, 3
      %p191 = por %p189, %p190
      %p192 = scmp.ne.s32.totalorder %s184, %s187
      %p193 = scmp.eq.s32.totalorder %s32, 0
      %p194 = por %p192, %p193
      %p195 = scmp.ne.s32.totalorder %s184, %s187
      %p196 = scmp.eq.s32.totalorder %s37, 3
      %p197 = por %p195, %p196
      %p198 = scmp.ne.s32.totalorder %s187, %s188
      %p199 = scmp.eq.s32.totalorder %s37, 0
      %p200 = por %p198, %p199
      %p201 = scmp.ne.s32.totalorder %s187, %s188
      %p202 = scmp.eq.s32.totalorder %s38, 3
      %p203 = por %p201, %p202
      %p205 = scmp.ne.s32.totalorder %s188, %s204
      %p206 = scmp.eq.s32.totalorder %s38, 0
      %p207 = por %p205, %p206
      %s208 = ssub.s32 %s40, %s47
      %p209 = scmp.eq.s32.totalorder %s208, 0
      %s211 = sadd.s32 %s210, 1
      %s212 = scalar_select %p209, %s210, %s211
      %p215 = pneg %p209
      %p216 = scmp.eq.s32.totalorder %s32, 3
      %p217 = por %p215, %p216
      %p218 = scmp.ne.s32.totalorder %s210, %s213
      %p219 = scmp.eq.s32.totalorder %s32, 0
      %p220 = por %p218, %p219
      %p221 = scmp.ne.s32.totalorder %s210, %s213
      %p222 = scmp.eq.s32.totalorder %s37, 3
      %p223 = por %p221, %p222
      %p224 = scmp.ne.s32.totalorder %s213, %s214
      %p225 = scmp.eq.s32.totalorder %s37, 0
      %p226 = por %p224, %p225
      %p227 = scmp.ne.s32.totalorder %s213, %s214
      %p228 = scmp.eq.s32.totalorder %s38, 3
      %p229 = por %p227, %p228
      %p231 = scmp.ne.s32.totalorder %s214, %s230
      %p232 = scmp.eq.s32.totalorder %s38, 0
      %p233 = por %p231, %p232
      %s234 = ssub.s32 %s40, %s47
      %p235 = scmp.eq.s32.totalorder %s234, 0
      %s237 = sadd.s32 %s236, 1
      %s238 = scalar_select %p235, %s236, %s237
      %p241 = pneg %p235
      %p242 = scmp.eq.s32.totalorder %s32, 3
      %p243 = por %p241, %p242
      %p244 = scmp.ne.s32.totalorder %s236, %s239
      %p245 = scmp.eq.s32.totalorder %s32, 0
      %p246 = por %p244, %p245
      %p247 = scmp.ne.s32.totalorder %s236, %s239
      %p248 = scmp.eq.s32.totalorder %s37, 3
      %p249 = por %p247, %p248
      %p250 = scmp.ne.s32.totalorder %s239, %s240
      %p251 = scmp.eq.s32.totalorder %s37, 0
      %p252 = por %p250, %p251
      %p253 = scmp.ne.s32.totalorder %s239, %s240
      %p254 = scmp.eq.s32.totalorder %s38, 3
      %p255 = por %p253, %p254
      %p257 = scmp.ne.s32.totalorder %s240, %s256
      %p258 = scmp.eq.s32.totalorder %s38, 0
      %p259 = por %p257, %p258
      %s260 = ssub.s32 %s40, %s47
      %p261 = scmp.eq.s32.totalorder %s260, 0
      %s263 = sadd.s32 %s262, 1
      %s264 = scalar_select %p261, %s262, %s263
      %p267 = pneg %p261
      %p268 = scmp.eq.s32.totalorder %s32, 3
      %p269 = por %p267, %p268
      %p270 = scmp.ne.s32.totalorder %s262, %s265
      %p271 = scmp.eq.s32.totalorder %s32, 0
      %p272 = por %p270, %p271
      %p273 = scmp.ne.s32.totalorder %s262, %s265
      %p274 = scmp.eq.s32.totalorder %s37, 3
      %p275 = por %p273, %p274
      %p276 = scmp.ne.s32.totalorder %s265, %s266
      %p277 = scmp.eq.s32.totalorder %s37, 0
      %p278 = por %p276, %p277
      %p279 = scmp.ne.s32.totalorder %s265, %s266
      %p280 = scmp.eq.s32.totalorder %s38, 3
      %p281 = por %p279, %p280
      %p283 = scmp.ne.s32.totalorder %s266, %s282
      %p284 = scmp.eq.s32.totalorder %s38, 0
      %p285 = por %p283, %p284
      %s286 = ssub.s32 %s40, %s47
      %p287 = scmp.eq.s32.totalorder %s286, 0
      %s289 = sadd.s32 %s288, 1
      %s290 = scalar_select %p287, %s288, %s289
      %p293 = pneg %p287
      %p294 = scmp.eq.s32.totalorder %s32, 3
      %p295 = por %p293, %p294
      %p296 = scmp.ne.s32.totalorder %s288, %s291
      %p297 = scmp.eq.s32.totalorder %s32, 0
      %p298 = por %p296, %p297
      %p299 = scmp.ne.s32.totalorder %s288, %s291
      %p300 = scmp.eq.s32.totalorder %s37, 3
      %p301 = por %p299, %p300
      %p302 = scmp.ne.s32.totalorder %s291, %s292
      %p303 = scmp.eq.s32.totalorder %s37, 0
      %p304 = por %p302, %p303
      %p305 = scmp.ne.s32.totalorder %s291, %s292
      %p306 = scmp.eq.s32.totalorder %s38, 3
      %p307 = por %p305, %p306
      %p309 = scmp.ne.s32.totalorder %s292, %s308
      %p310 = scmp.eq.s32.totalorder %s38, 0
      %p311 = por %p309, %p310
      %s312 = ssub.s32 %s40, %s47
      %p313 = scmp.eq.s32.totalorder %s312, 0
      %s315 = sadd.s32 %s314, 1
      %s316 = scalar_select %p313, %s314, %s315
      %p319 = pneg %p313
      %p320 = scmp.eq.s32.totalorder %s32, 3
      %p321 = por %p319, %p320
      %p322 = scmp.ne.s32.totalorder %s314, %s317
      %p323 = scmp.eq.s32.totalorder %s32, 0
      %p324 = por %p322, %p323
      %p325 = scmp.ne.s32.totalorder %s314, %s317
      %p326 = scmp.eq.s32.totalorder %s37, 3
      %p327 = por %p325, %p326
      %p328 = scmp.ne.s32.totalorder %s317, %s318
      %p329 = scmp.eq.s32.totalorder %s37, 0
      %p330 = por %p328, %p329
      %p331 = scmp.ne.s32.totalorder %s317, %s318
      %p332 = scmp.eq.s32.totalorder %s38, 3
      %p333 = por %p331, %p332
      %p335 = scmp.ne.s32.totalorder %s318, %s334
      %p336 = scmp.eq.s32.totalorder %s38, 0
      %p337 = por %p335, %p336
      %s338 = ssub.s32 %s40, %s47
      %p339 = scmp.eq.s32.totalorder %s338, 0
      %s341 = sadd.s32 %s340, 1
      %s342 = scalar_select %p339, %s340, %s341
      %p345 = pneg %p339
      %p346 = scmp.eq.s32.totalorder %s32, 3
      %p347 = por %p345, %p346
      %p348 = scmp.ne.s32.totalorder %s340, %s343
      %p349 = scmp.eq.s32.totalorder %s32, 0
      %p350 = por %p348, %p349
      %p351 = scmp.ne.s32.totalorder %s340, %s343
      %p352 = scmp.eq.s32.totalorder %s37, 3
      %p353 = por %p351, %p352
      %p354 = scmp.ne.s32.totalorder %s343, %s344
      %p355 = scmp.eq.s32.totalorder %s37, 0
      %p356 = por %p354, %p355
      %p357 = scmp.ne.s32.totalorder %s343, %s344
      %p358 = scmp.eq.s32.totalorder %s38, 3
      %p359 = por %p357, %p358
      %p361 = scmp.ne.s32.totalorder %s344, %s360
      %p362 = scmp.eq.s32.totalorder %s38, 0
      %p363 = por %p361, %p362
      %s364 = ssub.s32 %s40, %s47
      %p365 = scmp.eq.s32.totalorder %s364, 0
      %s367 = sadd.s32 %s366, 1
      %s368 = scalar_select %p365, %s366, %s367
      %p371 = pneg %p365
      %p372 = scmp.eq.s32.totalorder %s32, 3
      %p373 = por %p371, %p372
      %p374 = scmp.ne.s32.totalorder %s366, %s369
      %p375 = scmp.eq.s32.totalorder %s32, 0
      %p376 = por %p374, %p375
      %p377 = scmp.ne.s32.totalorder %s366, %s369
      %p378 = scmp.eq.s32.totalorder %s37, 3
      %p379 = por %p377, %p378
      %p380 = scmp.ne.s32.totalorder %s369, %s370
      %p381 = scmp.eq.s32.totalorder %s37, 0
      %p382 = por %p380, %p381
      %p383 = scmp.ne.s32.totalorder %s369, %s370
      %p384 = scmp.eq.s32.totalorder %s38, 3
      %p385 = por %p383, %p384
      %p387 = scmp.ne.s32.totalorder %s370, %s386
      %p388 = scmp.eq.s32.totalorder %s38, 0
      %p389 = por %p387, %p388
      %s390 = ssub.s32 %s40, %s47
      %p391 = scmp.eq.s32.totalorder %s390, 0
      %s393 = sadd.s32 %s392, 1
      %s394 = scalar_select %p391, %s392, %s393
      %p397 = pneg %p391
      %p398 = scmp.eq.s32.totalorder %s32, 3
      %p399 = por %p397, %p398
      %p400 = scmp.ne.s32.totalorder %s392, %s395
      %p401 = scmp.eq.s32.totalorder %s32, 0
      %p402 = por %p400, %p401
      %p403 = scmp.ne.s32.totalorder %s392, %s395
      %p404 = scmp.eq.s32.totalorder %s37, 3
      %p405 = por %p403, %p404
      %p406 = scmp.ne.s32.totalorder %s395, %s396
      %p407 = scmp.eq.s32.totalorder %s37, 0
      %p408 = por %p406, %p407
      %p409 = scmp.ne.s32.totalorder %s395, %s396
      %p410 = scmp.eq.s32.totalorder %s38, 3
      %p411 = por %p409, %p410
      %p413 = scmp.ne.s32.totalorder %s396, %s412
      %p414 = scmp.eq.s32.totalorder %s38, 0
      %p415 = por %p413, %p414
      %s416 = ssub.s32 %s39, %s51
      %p417 = scmp.eq.s32.totalorder %s416, 0
      %s419 = sadd.s32 %s418, 1
      %s420 = scalar_select %p417, %s418, %s419
      %p423 = pneg %p417
      %p424 = scmp.eq.s32.totalorder %s32, 3
      %p425 = por %p423, %p424
      %p426 = scmp.ne.s32.totalorder %s418, %s421
      %p427 = scmp.eq.s32.totalorder %s32, 0
      %p428 = por %p426, %p427
      %p429 = scmp.ne.s32.totalorder %s418, %s421
      %p430 = scmp.eq.s32.totalorder %s37, 3
      %p431 = por %p429, %p430
      %p432 = scmp.ne.s32.totalorder %s421, %s422
      %p433 = scmp.eq.s32.totalorder %s37, 0
      %p434 = por %p432, %p433
      %p435 = scmp.ne.s32.totalorder %s421, %s422
      %p436 = scmp.eq.s32.totalorder %s38, 3
      %p437 = por %p435, %p436
      %p439 = scmp.ne.s32.totalorder %s422, %s438
      %p440 = scmp.eq.s32.totalorder %s38, 0
      %p441 = por %p439, %p440
      %p442 = scmp.le.s32.totalorder 1, %s32
      %p443 = scmp.lt.s32.totalorder %s32, 5
      %p444 = pnand %p442, %p443
      %p445 = pneg %p444
      // Predicated region
      $region9: #{tpu_custom_call.1} parent=5 // pred_check
        _
      $region10: #{tpu_custom_call.1} parent=5 // pred_check_branch
        %447 = sbr.rel (%p444) target = $region12
      $region11: #{tpu_custom_call.1} parent=5 // pred_region
        %s448 = ssub.s32 %s32, 1
      $region12: #{tpu_custom_call.1} parent=5 // pred_fallthru
        _
      %p449 = scmp.lt.s32.totalorder %s32, 4
      // Predicated region
      $region13: #{tpu_custom_call.1} parent=5 // pred_check
        %p450 = pneg %p449
      $region14: #{tpu_custom_call.1} parent=5 // pred_check_branch
        %452 = sbr.rel (%p450) target = $region16
      $region15: #{tpu_custom_call.1} parent=5 // pred_region
        // Predicated region
        $region17: #{tpu_custom_call.1} parent=15 // pred_check
          %p453 = pneg %p64
        $region18: #{tpu_custom_call.1} parent=15 // pred_check_branch
          %455 = sbr.rel (%p453) target = $region20
        $region19: #{tpu_custom_call.1} parent=15 // pred_region
          %s456 = sand.u32 %s54, 1
          %s457 = scalar_lea.sflag [#allocation3], %s456
          %s458 = sand.u32 %s54, 1
          %s459 = smul.addr %s458, 8
          %s460 = scalar_lea.vmem [#allocation2], %s459
          %462 = vsyncadd %s457, 0
          %s463 = smul.addr %s39, 8
          %s464 = scalar_lea.hbm %s0, %s463
          %s466 = sshll.u32 %s464, 4
          %s467 = int_to_ptr.hbm [resolvable:$true] %s466
          %s468 = sshll.u32 %s460, 4
          %s469 = int_to_ptr.vmem [resolvable:$true] %s468
          %471 = dma.hbm_to_vmem [thread:$0]  %s467, 128, %s469, %s457
        $region20: #{tpu_custom_call.1} parent=15 // pred_fallthru
          _
        // Predicated region
        $region21: #{tpu_custom_call.1} parent=15 // pred_check
          %p472 = pneg %p90
        $region22: #{tpu_custom_call.1} parent=15 // pred_check_branch
          %474 = sbr.rel (%p472) target = $region24
        $region23: #{tpu_custom_call.1} parent=15 // pred_region
          %s475 = sand.u32 %s32, 1
          %s476 = scalar_lea.sflag [#allocation6], %s475
          %s477 = sand.u32 %s80, 1
          %s478 = scalar_lea.vmem [#allocation5], %s477
          %480 = vsyncadd %s476, 0
          %s481 = scalar_lea.hbm %s1, %s39
          %s483 = sshll.u32 %s481, 4
          %s484 = int_to_ptr.hbm [resolvable:$true] %s483
          %s485 = sshll.u32 %s478, 4
          %s486 = int_to_ptr.vmem [resolvable:$true] %s485
          %488 = dma.hbm_to_vmem [thread:$0]  %s484, 16, %s486, %s476
        $region24: #{tpu_custom_call.1} parent=15 // pred_fallthru
          _
        // Predicated region
        $region25: #{tpu_custom_call.1} parent=15 // pred_check
          %p489 = pneg %p116
        $region26: #{tpu_custom_call.1} parent=15 // pred_check_branch
          %491 = sbr.rel (%p489) target = $region28
        $region27: #{tpu_custom_call.1} parent=15 // pred_region
          %p492 = scmp.lt.s32.totalorder %s40, 1
          %s493 = scalar_select %p492, %s40, 1
          %s494 = smul.addr %s493, 4
          %s495 = smul.addr %s494, 4
          %s496 = scalar_lea.vmem %s2, %s495
        $region28: #{tpu_custom_call.1} parent=15 // pred_fallthru
          _
        // Predicated region
        $region29: #{tpu_custom_call.1} parent=15 // pred_check
          %p497 = pneg %p142
        $region30: #{tpu_custom_call.1} parent=15 // pred_check_branch
          %499 = sbr.rel (%p497) target = $region32
        $region31: #{tpu_custom_call.1} parent=15 // pred_region
          %s500 = sand.u32 %s32, 1
          %s501 = scalar_lea.sflag [#allocation6], %s500
          %s502 = sand.u32 %s132, 1
          %s503 = scalar_lea.vmem [#allocation7], %s502
          %505 = vsyncadd %s501, 0
          %s506 = scalar_lea.hbm %s3, %s40
          %s508 = sshll.u32 %s506, 4
          %s509 = int_to_ptr.hbm [resolvable:$true] %s508
          %s510 = sshll.u32 %s503, 4
          %s511 = int_to_ptr.vmem [resolvable:$true] %s510
          %513 = dma.hbm_to_vmem [thread:$0]  %s509, 16, %s511, %s501
        $region32: #{tpu_custom_call.1} parent=15 // pred_fallthru
          _
        // Predicated region
        $region33: #{tpu_custom_call.1} parent=15 // pred_check
          %p514 = pneg %p168
        $region34: #{tpu_custom_call.1} parent=15 // pred_check_branch
          %516 = sbr.rel (%p514) target = $region36
        $region35: #{tpu_custom_call.1} parent=15 // pred_region
          %p517 = scmp.lt.s32.totalorder %s40, 1
          %s518 = scalar_select %p517, %s40, 1
          %s519 = smul.addr %s518, 4
          %s520 = smul.addr %s519, 4
          %s521 = scalar_lea.vmem %s4, %s520
        $region36: #{tpu_custom_call.1} parent=15 // pred_fallthru
          _
        // Predicated region
        $region37: #{tpu_custom_call.1} parent=15 // pred_check
          %p522 = pneg %p194
        $region38: #{tpu_custom_call.1} parent=15 // pred_check_branch
          %524 = sbr.rel (%p522) target = $region40
        $region39: #{tpu_custom_call.1} parent=15 // pred_region
          %p525 = scmp.lt.s32.totalorder %s40, 1
          %s526 = scalar_select %p525, %s40, 1
          %s527 = scalar_lea.vmem %s5, %s526
        $region40: #{tpu_custom_call.1} parent=15 // pred_fallthru
          _
        // Predicated region
        $region41: #{tpu_custom_call.1} parent=15 // pred_check
          %p528 = pneg %p220
        $region42: #{tpu_custom_call.1} parent=15 // pred_check_branch
          %530 = sbr.rel (%p528) target = $region44
        $region43: #{tpu_custom_call.1} parent=15 // pred_region
          %p531 = scmp.lt.s32.totalorder %s40, 1
          %s532 = scalar_select %p531, %s40, 1
          %s533 = scalar_lea.vmem %s6, %s532
        $region44: #{tpu_custom_call.1} parent=15 // pred_fallthru
          _
        // Predicated region
        $region45: #{tpu_custom_call.1} parent=15 // pred_check
          %p534 = pneg %p246
        $region46: #{tpu_custom_call.1} parent=15 // pred_check_branch
          %536 = sbr.rel (%p534) target = $region48
        $region47: #{tpu_custom_call.1} parent=15 // pred_region
          %s537 = sand.u32 %s32, 1
          %s538 = scalar_lea.sflag [#allocation9], %s537
          %s539 = sand.u32 %s236, 1
          %s540 = scalar_lea.vmem [#allocation8], %s539
          %542 = vsyncadd %s538, 0
          %s543 = scalar_lea.hbm %s7, %s40
          %s545 = sshll.u32 %s543, 4
          %s546 = int_to_ptr.hbm [resolvable:$true] %s545
          %s547 = sshll.u32 %s540, 4
          %s548 = int_to_ptr.vmem [resolvable:$true] %s547
          %550 = dma.hbm_to_vmem [thread:$0]  %s546, 16, %s548, %s538
        $region48: #{tpu_custom_call.1} parent=15 // pred_fallthru
          _
        // Predicated region
        $region49: #{tpu_custom_call.1} parent=15 // pred_check
          %p551 = pneg %p272
        $region50: #{tpu_custom_call.1} parent=15 // pred_check_branch
          %553 = sbr.rel (%p551) target = $region52
        $region51: #{tpu_custom_call.1} parent=15 // pred_region
          %p554 = scmp.lt.s32.totalorder %s40, 1
          %s555 = scalar_select %p554, %s40, 1
          %s556 = smul.addr %s555, 4
          %s557 = smul.addr %s556, 4
          %s558 = scalar_lea.vmem %s8, %s557
        $region52: #{tpu_custom_call.1} parent=15 // pred_fallthru
          _
        // Predicated region
        $region53: #{tpu_custom_call.1} parent=15 // pred_check
          %p559 = pneg %p298
        $region54: #{tpu_custom_call.1} parent=15 // pred_check_branch
          %561 = sbr.rel (%p559) target = $region56
        $region55: #{tpu_custom_call.1} parent=15 // pred_region
          %p562 = scmp.lt.s32.totalorder %s40, 1
          %s563 = scalar_select %p562, %s40, 1
          %s564 = scalar_lea.vmem %s9, %s563
        $region56: #{tpu_custom_call.1} parent=15 // pred_fallthru
          _
        // Predicated region
        $region57: #{tpu_custom_call.1} parent=15 // pred_check
          %p565 = pneg %p324
        $region58: #{tpu_custom_call.1} parent=15 // pred_check_branch
          %567 = sbr.rel (%p565) target = $region60
        $region59: #{tpu_custom_call.1} parent=15 // pred_region
          %p568 = scmp.lt.s32.totalorder %s40, 1
          %s569 = scalar_select %p568, %s40, 1
          %s570 = smul.addr %s569, 8
          %s571 = smul.addr %s570, 4
          %s572 = scalar_lea.vmem %s10, %s571
        $region60: #{tpu_custom_call.1} parent=15 // pred_fallthru
          _
        // Predicated region
        $region61: #{tpu_custom_call.1} parent=15 // pred_check
          %p573 = pneg %p350
        $region62: #{tpu_custom_call.1} parent=15 // pred_check_branch
          %575 = sbr.rel (%p573) target = $region64
        $region63: #{tpu_custom_call.1} parent=15 // pred_region
          %p576 = scmp.lt.s32.totalorder %s40, 1
          %s577 = scalar_select %p576, %s40, 1
          %s578 = scalar_lea.vmem %s11, %s577
        $region64: #{tpu_custom_call.1} parent=15 // pred_fallthru
          _
        // Predicated region
        $region65: #{tpu_custom_call.1} parent=15 // pred_check
          %p579 = pneg %p376
        $region66: #{tpu_custom_call.1} parent=15 // pred_check_branch
          %581 = sbr.rel (%p579) target = $region68
        $region67: #{tpu_custom_call.1} parent=15 // pred_region
          %p582 = scmp.lt.s32.totalorder %s40, 1
          %s583 = scalar_select %p582, %s40, 1
          %s584 = scalar_lea.vmem %s12, %s583
        $region68: #{tpu_custom_call.1} parent=15 // pred_fallthru
          _
        // Predicated region
        $region69: #{tpu_custom_call.1} parent=15 // pred_check
          %p585 = pneg %p402
        $region70: #{tpu_custom_call.1} parent=15 // pred_check_branch
          %587 = sbr.rel (%p585) target = $region72
        $region71: #{tpu_custom_call.1} parent=15 // pred_region
          %s588 = sand.u32 %s32, 1
          %s589 = scalar_lea.sflag [#allocation9], %s588
          %s590 = sand.u32 %s392, 1
          %s591 = scalar_lea.vmem [#allocation10], %s590
          %593 = vsyncadd %s589, 0
          %s594 = scalar_lea.hbm %s13, %s40
          %s596 = sshll.u32 %s594, 4
          %s597 = int_to_ptr.hbm [resolvable:$true] %s596
          %s598 = sshll.u32 %s591, 4
          %s599 = int_to_ptr.vmem [resolvable:$true] %s598
          %601 = dma.hbm_to_vmem [thread:$0]  %s597, 16, %s599, %s589
        $region72: #{tpu_custom_call.1} parent=15 // pred_fallthru
          _
      $region16: #{tpu_custom_call.1} parent=5 // pred_fallthru
        _
      %p602 = scmp.le.s32.totalorder 1, %s32
      %p603 = scmp.lt.s32.totalorder %s32, 5
      %p604 = pnand %p602, %p603
      %p605 = pneg %p604
      // Predicated region
      $region73: #{tpu_custom_call.1} parent=5 // pred_check
        _
      $region74: #{tpu_custom_call.1} parent=5 // pred_check_branch
        %607 = sbr.rel (%p604) target = $region76
      $region75: #{tpu_custom_call.1} parent=5 // pred_region
        %s608 = ssub.s32 %s32, 1
        %s609 = sand.u32 %s57, 1
        %s610 = scalar_lea.sflag [#allocation3], %s609
        %s611 = sand.u32 %s57, 1
        %s612 = smul.addr %s611, 8
        %s613 = scalar_lea.vmem [#allocation2], %s612
        // Predicated region
        $region77: #{tpu_custom_call.1} parent=75 // pred_check
          %p614 = pneg %p70
        $region78: #{tpu_custom_call.1} parent=75 // pred_check_branch
          %616 = sbr.rel (%p614) target = $region80
        $region79: #{tpu_custom_call.1} parent=75 // pred_region
          %618 = dma.done %s610, 128
        $region80: #{tpu_custom_call.1} parent=75 // pred_fallthru
          _
        %s619 = sand.u32 %s37, 1
        %s620 = scalar_lea.sflag [#allocation6], %s619
        %s621 = sand.u32 %s83, 1
        %s622 = scalar_lea.vmem [#allocation5], %s621
        // Predicated region
        $region81: #{tpu_custom_call.1} parent=75 // pred_check
          %p623 = pneg %p96
        $region82: #{tpu_custom_call.1} parent=75 // pred_check_branch
          %625 = sbr.rel (%p623) target = $region84
        $region83: #{tpu_custom_call.1} parent=75 // pred_region
          %627 = dma.done %s620, 16
        $region84: #{tpu_custom_call.1} parent=75 // pred_fallthru
          _
        %s628 = sand.u32 %s37, 1
        %s629 = scalar_lea.sflag [#allocation6], %s628
        %s630 = sand.u32 %s135, 1
        %s631 = scalar_lea.vmem [#allocation7], %s630
        // Predicated region
        $region85: #{tpu_custom_call.1} parent=75 // pred_check
          %p632 = pneg %p148
        $region86: #{tpu_custom_call.1} parent=75 // pred_check_branch
          %634 = sbr.rel (%p632) target = $region88
        $region87: #{tpu_custom_call.1} parent=75 // pred_region
          %636 = dma.done %s629, 16
        $region88: #{tpu_custom_call.1} parent=75 // pred_fallthru
          _
        %s637 = sand.u32 %s37, 1
        %s638 = scalar_lea.sflag [#allocation9], %s637
        %s639 = sand.u32 %s239, 1
        %s640 = scalar_lea.vmem [#allocation8], %s639
        // Predicated region
        $region89: #{tpu_custom_call.1} parent=75 // pred_check
          %p641 = pneg %p252
        $region90: #{tpu_custom_call.1} parent=75 // pred_check_branch
          %643 = sbr.rel (%p641) target = $region92
        $region91: #{tpu_custom_call.1} parent=75 // pred_region
          %645 = dma.done %s638, 16
        $region92: #{tpu_custom_call.1} parent=75 // pred_fallthru
          _
        %s646 = sand.u32 %s37, 1
        %s647 = scalar_lea.sflag [#allocation9], %s646
        %s648 = sand.u32 %s395, 1
        %s649 = scalar_lea.vmem [#allocation10], %s648
        // Predicated region
        $region93: #{tpu_custom_call.1} parent=75 // pred_check
          %p650 = pneg %p408
        $region94: #{tpu_custom_call.1} parent=75 // pred_check_branch
          %652 = sbr.rel (%p650) target = $region96
        $region95: #{tpu_custom_call.1} parent=75 // pred_region
          %654 = dma.done %s647, 16
        $region96: #{tpu_custom_call.1} parent=75 // pred_fallthru
          _
        %s655 = sand.u32 %s57, 1
        %s656 = scalar_lea.sflag [#allocation3], %s655
        %s657 = sand.u32 %s57, 1
        %s658 = smul.addr %s657, 8
        %s659 = scalar_lea.vmem [#allocation2], %s658
        %p660 = pneg %p70
        %p661 = pneg %p67
        %s662 = sand.u32 %s37, 1
        %s663 = scalar_lea.sflag [#allocation6], %s662
        %s664 = sand.u32 %s83, 1
        %s665 = scalar_lea.vmem [#allocation5], %s664
        %p666 = pneg %p96
        %p667 = pneg %p93
        %p668 = scmp.lt.s32.totalorder %s42, 1
        %s669 = scalar_select %p668, %s42, 1
        %s670 = smul.addr %s669, 4
        %s671 = smul.addr %s670, 4
        %s672 = scalar_lea.vmem %s2, %s671
        %p673 = pneg %p122
        %p674 = pneg %p119
        %s675 = sand.u32 %s37, 1
        %s676 = scalar_lea.sflag [#allocation6], %s675
        %s677 = sand.u32 %s135, 1
        %s678 = scalar_lea.vmem [#allocation7], %s677
        %p679 = pneg %p148
        %p680 = pneg %p145
        %p681 = scmp.lt.s32.totalorder %s42, 1
        %s682 = scalar_select %p681, %s42, 1
        %s683 = smul.addr %s682, 4
        %s684 = smul.addr %s683, 4
        %s685 = scalar_lea.vmem %s4, %s684
        %p686 = pneg %p174
        %p687 = pneg %p171
        %p688 = scmp.lt.s32.totalorder %s42, 1
        %s689 = scalar_select %p688, %s42, 1
        %s690 = scalar_lea.vmem %s5, %s689
        %p691 = pneg %p200
        %p692 = pneg %p197
        %p693 = scmp.lt.s32.totalorder %s42, 1
        %s694 = scalar_select %p693, %s42, 1
        %s695 = scalar_lea.vmem %s6, %s694
        %p696 = pneg %p226
        %p697 = pneg %p223
        %s698 = sand.u32 %s37, 1
        %s699 = scalar_lea.sflag [#allocation9], %s698
        %s700 = sand.u32 %s239, 1
        %s701 = scalar_lea.vmem [#allocation8], %s700
        %p702 = pneg %p252
        %p703 = pneg %p249
        %p704 = scmp.lt.s32.totalorder %s42, 1
        %s705 = scalar_select %p704, %s42, 1
        %s706 = smul.addr %s705, 4
        %s707 = smul.addr %s706, 4
        %s708 = scalar_lea.vmem %s8, %s707
        %p709 = pneg %p278
        %p710 = pneg %p275
        %p711 = scmp.lt.s32.totalorder %s42, 1
        %s712 = scalar_select %p711, %s42, 1
        %s713 = scalar_lea.vmem %s9, %s712
        %p714 = pneg %p304
        %p715 = pneg %p301
        %p716 = scmp.lt.s32.totalorder %s42, 1
        %s717 = scalar_select %p716, %s42, 1
        %s718 = smul.addr %s717, 8
        %s719 = smul.addr %s718, 4
        %s720 = scalar_lea.vmem %s10, %s719
        %p721 = pneg %p330
        %p722 = pneg %p327
        %p723 = scmp.lt.s32.totalorder %s42, 1
        %s724 = scalar_select %p723, %s42, 1
        %s725 = scalar_lea.vmem %s11, %s724
        %p726 = pneg %p356
        %p727 = pneg %p353
        %p728 = scmp.lt.s32.totalorder %s42, 1
        %s729 = scalar_select %p728, %s42, 1
        %s730 = scalar_lea.vmem %s12, %s729
        %p731 = pneg %p382
        %p732 = pneg %p379
        %s733 = sand.u32 %s37, 1
        %s734 = scalar_lea.sflag [#allocation9], %s733
        %s735 = sand.u32 %s395, 1
        %s736 = scalar_lea.vmem [#allocation10], %s735
        %p737 = pneg %p408
        %p738 = pneg %p405
        %p739 = pneg %p434
        %p740 = pneg %p431
        %s741 = sand.u32 %s421, 1
        %s742 = scalar_lea.sflag [#allocation4], %s741
        %s743 = sand.u32 %s421, 1
        %s744 = smul.addr %s743, 8
        %s745 = scalar_lea.vmem [#allocation11], %s744
        %p746 = scmp.lt.s32.totalorder %s42, 1
        %s747 = scalar_select %p746, %s42, 1
        %s748 = smul.addr %s747, 4
        %s749 = smul.addr %s748, 4
        %s750 = scalar_lea.vmem %s2, %s749
        %p751 = scmp.lt.s32.totalorder %s42, 1
        %s752 = scalar_select %p751, %s42, 1
        %s753 = smul.addr %s752, 4
        %s754 = smul.addr %s753, 4
        %s755 = scalar_lea.vmem %s4, %s754
        %p756 = scmp.lt.s32.totalorder %s42, 1
        %s757 = scalar_select %p756, %s42, 1
        %s758 = scalar_lea.vmem %s5, %s757
        %p759 = scmp.lt.s32.totalorder %s42, 1
        %s760 = scalar_select %p759, %s42, 1
        %s761 = scalar_lea.vmem %s6, %s760
        %p762 = scmp.lt.s32.totalorder %s42, 1
        %s763 = scalar_select %p762, %s42, 1
        %s764 = smul.addr %s763, 4
        %s765 = smul.addr %s764, 4
        %s766 = scalar_lea.vmem %s8, %s765
        %p767 = scmp.lt.s32.totalorder %s42, 1
        %s768 = scalar_select %p767, %s42, 1
        %s769 = scalar_lea.vmem %s9, %s768
        %p770 = scmp.lt.s32.totalorder %s42, 1
        %s771 = scalar_select %p770, %s42, 1
        %s772 = smul.addr %s771, 8
        %s773 = smul.addr %s772, 4
        %s774 = scalar_lea.vmem %s10, %s773
        %p775 = scmp.lt.s32.totalorder %s42, 1
        %s776 = scalar_select %p775, %s42, 1
        %s777 = scalar_lea.vmem %s11, %s776
        %p778 = scmp.lt.s32.totalorder %s42, 1
        %s779 = scalar_select %p778, %s42, 1
        %s780 = scalar_lea.vmem %s12, %s779
        %p782 = scmp.eq.s32.totalorder %s42, 0
        // Predicated region
        $region97: #{tpu_custom_call.1} parent=75 // pred_check
          %p783 = pneg %p782
        $region98: #{tpu_custom_call.1} parent=75 // pred_check_branch
          %785 = sbr.rel (%p783) target = $region100
        $region99: #{tpu_custom_call.1} parent=75 // pred_region
          %v786 = vld [vmem:[%s613] sm:$0xff]
          %vm787 = vcmask 261120
          %788 = vst.msk [vmem:[%s745] sm:$0xff] %vm787, %v786
        $region100: #{tpu_custom_call.1} parent=75 // pred_fallthru
          _
        %v789 = vld [vmem:[%s745] sm:$0xff]
        %v790 = vld [vmem:[%s622] sm:$0x1]
        %v791 = vpack.c.bf16 %v789, %v789
        %v792 = vld [vmem:[%s750] sm:$0xf]
        %v793 = vld [vmem:[%s750 + $0x4] sm:$0xf]
        %v794 = vld [vmem:[%s750 + $0x8] sm:$0xf]
        %v795 = vld [vmem:[%s750 + $0xc] sm:$0xf]
        %v796 = vld [vmem:[%s631] sm:$0x1]
        %v798 = vperm.slane %v796, 0
        %v804 = vunpack.c.l.b16 %v792
        %v805 = vunpack.c.l.b16 %v793
        %v806 = vunpack.c.l.b16 %v794
        %v807 = vunpack.c.l.b16 %v795
        %v808 = vpack.c.b16 %v805, %v804
        %v809 = vpack.c.b16 %v807, %v806
        %vm812 = vcmask 261120
        %v814 = vsel %vm812, %v791, 0
        %816 = vmatpush.bf16.msra.mxu0 0
        %817 = vmatpush.bf16.msra.mxu0 0
        %818 = vmatpush.bf16.msra.mxu0 0
        %819 = vmatpush.bf16.msra.mxu0 0
        %820 = vmatpush.bf16.msra.mxu0 0
        %821 = vmatpush.bf16.msra.mxu0 0
        %822 = vmatpush.bf16.msra.mxu0 %v809
        %823 = vmatpush.bf16.msra.mxu0 %v808
        %824 = vmatmul.bf16.gmra.mxu0 %v814
        %v825 = vpop.f32.mrf.mxu0
        %v826 = vadd.f32 %v798, %v825
        %v827 = vpop.f32.mrf.mxu0
        %828 = vdwg.mxu0
        %830 = vrot.lane.b32.xlu0 %v826, 120
        %v831 = vpop.permute.xlu0 %830
        %833 = vrot.lane.b32.xlu0 %v826, 112
        %v834 = vpop.permute.xlu0 %833
        %836 = vrot.lane.b32.xlu0 %v826, 104
        %v837 = vpop.permute.xlu0 %836
        %v839 = vrot.slane %v834, 4
        %vm840 = vcmask 1047556
        %v841 = vsel %vm840, %v839, %v826
        %v842 = vrot.slane %v826, 4
        %v843 = vsel %vm840, %v834, %v842
        %v845 = vunpack.c.l.s4 1983009808
        %v846 = vunpack.c.0.s8 %v845
        %v847 = vperm.slane %v841, %v846
        %v849 = vunpack.c.l.s4 1983009808
        %v850 = vunpack.c.0.s8 %v849
        %v851 = vperm.slane %v843, %v850
        %v852 = vrot.slane %v837, 4
        %v853 = vsel %vm840, %v852, %v831
        %v854 = vrot.slane %v831, 4
        %v855 = vsel %vm840, %v837, %v854
        %v857 = vunpack.c.l.s4 1983009808
        %v858 = vunpack.c.0.s8 %v857
        %v859 = vperm.slane %v853, %v858
        %v861 = vunpack.c.l.s4 1983009808
        %v862 = vunpack.c.0.s8 %v861
        %v863 = vperm.slane %v855, %v862
        %v864 = vrot.slane %v859, 4
        %v865 = vsel %vm840, %v864, %v847
        %v866 = vrot.slane %v847, 4
        %v867 = vsel %vm840, %v859, %v866
        %v869 = vunpack.c.l.s4 1934713408
        %v870 = vunpack.c.0.s8 %v869
        %v871 = vperm.slane %v865, %v870
        %v873 = vunpack.c.l.s4 1934713408
        %v874 = vunpack.c.0.s8 %v873
        %v875 = vperm.slane %v867, %v874
        %v876 = vrot.slane %v863, 4
        %v877 = vsel %vm840, %v876, %v851
        %v878 = vrot.slane %v851, 4
        %v879 = vsel %vm840, %v863, %v878
        %v881 = vunpack.c.l.s4 1934713408
        %v882 = vunpack.c.0.s8 %v881
        %v883 = vperm.slane %v877, %v882
        %v885 = vunpack.c.l.s4 1934713408
        %v886 = vunpack.c.0.s8 %v885
        %v887 = vperm.slane %v879, %v886
        %v888 = vrot.slane %v871, 4
        %v889 = vsel %vm840, 0.0, %v888
        %v890 = vrot.slane %v875, 4
        %v891 = vsel %vm840, 0.0, %v890
        %v892 = vrot.slane %v883, 4
        %v893 = vsel %vm840, 0.0, %v892
        %v894 = vrot.slane %v887, 4
        %v895 = vsel %vm840, 0.0, %v894
        %v896 = vsel %vm840, %v890, %v871
        %v898 = vunpack.c.l.s4 1983009808
        %v899 = vunpack.c.0.s8 %v898
        %v900 = vperm.slane %v896, %v899
        %v901 = vrot.slane %v891, 4
        %v902 = vsel %vm840, %v901, %v889
        %v904 = vunpack.c.l.s4 1983009808
        %v905 = vunpack.c.0.s8 %v904
        %v906 = vperm.slane %v902, %v905
        %v907 = vsel %vm840, %v894, %v883
        %v909 = vunpack.c.l.s4 1983009808
        %v910 = vunpack.c.0.s8 %v909
        %v911 = vperm.slane %v907, %v910
        %v912 = vrot.slane %v895, 4
        %v913 = vsel %vm840, %v912, %v893
        %v915 = vunpack.c.l.s4 1983009808
        %v916 = vunpack.c.0.s8 %v915
        %v917 = vperm.slane %v913, %v916
        %v918 = vrot.slane %v906, 4
        %v919 = vsel %vm840, %v918, %v900
        %v920 = vrot.slane %v900, 4
        %v921 = vsel %vm840, %v906, %v920
        %v923 = vunpack.c.l.s4 1934713408
        %v924 = vunpack.c.0.s8 %v923
        %v925 = vperm.slane %v919, %v924
        %v927 = vunpack.c.l.s4 1934713408
        %v928 = vunpack.c.0.s8 %v927
        %v929 = vperm.slane %v921, %v928
        %v930 = vrot.slane %v917, 4
        %v931 = vsel %vm840, %v930, %v911
        %v932 = vrot.slane %v911, 4
        %v933 = vsel %vm840, %v917, %v932
        %v935 = vunpack.c.l.s4 1934713408
        %v936 = vunpack.c.0.s8 %v935
        %v937 = vperm.slane %v931, %v936
        %v939 = vunpack.c.l.s4 1934713408
        %v940 = vunpack.c.0.s8 %v939
        %v941 = vperm.slane %v933, %v940
        %v942 = vrot.slane %v937, 4
        %v943 = vsel %vm840, %v942, %v925
        %v944 = vrot.slane %v925, 4
        %v945 = vsel %vm840, %v937, %v944
        %v946 = vrot.slane %v941, 4
        %v947 = vsel %vm840, %v946, %v929
        %v948 = vrot.slane %v929, 4
        %v949 = vsel %vm840, %v941, %v948
        %v950 = vpack.c.bf16 %v943, %v943
        %v951 = vpack.c.bf16 %v945, %v945
        %v952 = vpack.c.bf16 %v947, %v947
        %v953 = vpack.c.bf16 %v949, %v949
        %954 = vrot.lane.b32.xlu0 %v826, 96
        %v955 = vpop.permute.xlu0 %954
        %956 = vrot.lane.b32.xlu0 %v831, 96
        %v957 = vpop.permute.xlu0 %956
        %958 = vrot.lane.b32.xlu0 %v834, 96
        %v959 = vpop.permute.xlu0 %958
        %960 = vrot.lane.b32.xlu0 %v837, 96
        %v961 = vpop.permute.xlu0 %960
        %v966 = vrot.slane %v959, 4
        %v967 = vsel %vm840, %v966, %v955
        %v968 = vrot.slane %v955, 4
        %v969 = vsel %vm840, %v959, %v968
        %v971 = vunpack.c.l.s4 1983009808
        %v972 = vunpack.c.0.s8 %v971
        %v973 = vperm.slane %v967, %v972
        %v975 = vunpack.c.l.s4 1983009808
        %v976 = vunpack.c.0.s8 %v975
        %v977 = vperm.slane %v969, %v976
        %v978 = vrot.slane %v961, 4
        %v979 = vsel %vm840, %v978, %v957
        %v980 = vrot.slane %v957, 4
        %v981 = vsel %vm840, %v961, %v980
        %v983 = vunpack.c.l.s4 1983009808
        %v984 = vunpack.c.0.s8 %v983
        %v985 = vperm.slane %v979, %v984
        %v987 = vunpack.c.l.s4 1983009808
        %v988 = vunpack.c.0.s8 %v987
        %v989 = vperm.slane %v981, %v988
        %v990 = vrot.slane %v985, 4
        %v991 = vsel %vm840, %v990, %v973
        %v992 = vrot.slane %v973, 4
        %v993 = vsel %vm840, %v985, %v992
        %v995 = vunpack.c.l.s4 1934713408
        %v996 = vunpack.c.0.s8 %v995
        %v997 = vperm.slane %v991, %v996
        %v999 = vunpack.c.l.s4 1934713408
        %v1000 = vunpack.c.0.s8 %v999
        %v1001 = vperm.slane %v993, %v1000
        %v1002 = vrot.slane %v989, 4
        %v1003 = vsel %vm840, %v1002, %v977
        %v1004 = vrot.slane %v977, 4
        %v1005 = vsel %vm840, %v989, %v1004
        %v1007 = vunpack.c.l.s4 1934713408
        %v1008 = vunpack.c.0.s8 %v1007
        %v1009 = vperm.slane %v1003, %v1008
        %v1011 = vunpack.c.l.s4 1934713408
        %v1012 = vunpack.c.0.s8 %v1011
        %v1013 = vperm.slane %v1005, %v1012
        %v1014 = vrot.slane %v997, 4
        %v1015 = vsel %vm840, 0.0, %v1014
        %v1016 = vrot.slane %v1001, 4
        %v1017 = vsel %vm840, 0.0, %v1016
        %v1018 = vrot.slane %v1009, 4
        %v1019 = vsel %vm840, 0.0, %v1018
        %v1020 = vrot.slane %v1013, 4
        %v1021 = vsel %vm840, 0.0, %v1020
        %v1022 = vsel %vm840, %v1016, %v997
        %v1024 = vunpack.c.l.s4 1983009808
        %v1025 = vunpack.c.0.s8 %v1024
        %v1026 = vperm.slane %v1022, %v1025
        %v1027 = vrot.slane %v1017, 4
        %v1028 = vsel %vm840, %v1027, %v1015
        %v1030 = vunpack.c.l.s4 1983009808
        %v1031 = vunpack.c.0.s8 %v1030
        %v1032 = vperm.slane %v1028, %v1031
        %v1033 = vsel %vm840, %v1020, %v1009
        %v1035 = vunpack.c.l.s4 1983009808
        %v1036 = vunpack.c.0.s8 %v1035
        %v1037 = vperm.slane %v1033, %v1036
        %v1038 = vrot.slane %v1021, 4
        %v1039 = vsel %vm840, %v1038, %v1019
        %v1041 = vunpack.c.l.s4 1983009808
        %v1042 = vunpack.c.0.s8 %v1041
        %v1043 = vperm.slane %v1039, %v1042
        %v1044 = vrot.slane %v1032, 4
        %v1045 = vsel %vm840, %v1044, %v1026
        %v1046 = vrot.slane %v1026, 4
        %v1047 = vsel %vm840, %v1032, %v1046
        %v1049 = vunpack.c.l.s4 1934713408
        %v1050 = vunpack.c.0.s8 %v1049
        %v1051 = vperm.slane %v1045, %v1050
        %v1053 = vunpack.c.l.s4 1934713408
        %v1054 = vunpack.c.0.s8 %v1053
        %v1055 = vperm.slane %v1047, %v1054
        %v1056 = vrot.slane %v1043, 4
        %v1057 = vsel %vm840, %v1056, %v1037
        %v1058 = vrot.slane %v1037, 4
        %v1059 = vsel %vm840, %v1043, %v1058
        %v1061 = vunpack.c.l.s4 1934713408
        %v1062 = vunpack.c.0.s8 %v1061
        %v1063 = vperm.slane %v1057, %v1062
        %v1065 = vunpack.c.l.s4 1934713408
        %v1066 = vunpack.c.0.s8 %v1065
        %v1067 = vperm.slane %v1059, %v1066
        %v1068 = vrot.slane %v1063, 4
        %v1069 = vsel %vm840, %v1068, %v1051
        %v1070 = vrot.slane %v1051, 4
        %v1071 = vsel %vm840, %v1063, %v1070
        %v1072 = vrot.slane %v1067, 4
        %v1073 = vsel %vm840, %v1072, %v1055
        %v1074 = vrot.slane %v1055, 4
        %v1075 = vsel %vm840, %v1067, %v1074
        %v1076 = vpack.c.bf16 %v1069, %v1069
        %v1077 = vpack.c.bf16 %v1071, %v1071
        %v1078 = vpack.c.bf16 %v1073, %v1073
        %v1079 = vpack.c.bf16 %v1075, %v1075
        %1080 = vrot.lane.b32.xlu0 %v826, 64
        %v1081 = vpop.permute.xlu0 %1080
        %1082 = vrot.lane.b32.xlu0 %v831, 64
        %v1083 = vpop.permute.xlu0 %1082
        %1084 = vrot.lane.b32.xlu0 %v834, 64
        %v1085 = vpop.permute.xlu0 %1084
        %1086 = vrot.lane.b32.xlu0 %v837, 64
        %v1087 = vpop.permute.xlu0 %1086
        %v1092 = vrot.slane %v1085, 4
        %v1093 = vsel %vm840, %v1092, %v1081
        %v1094 = vrot.slane %v1081, 4
        %v1095 = vsel %vm840, %v1085, %v1094
        %v1097 = vunpack.c.l.s4 1983009808
        %v1098 = vunpack.c.0.s8 %v1097
        %v1099 = vperm.slane %v1093, %v1098
        %v1101 = vunpack.c.l.s4 1983009808
        %v1102 = vunpack.c.0.s8 %v1101
        %v1103 = vperm.slane %v1095, %v1102
        %v1104 = vrot.slane %v1087, 4
        %v1105 = vsel %vm840, %v1104, %v1083
        %v1106 = vrot.slane %v1083, 4
        %v1107 = vsel %vm840, %v1087, %v1106
        %v1109 = vunpack.c.l.s4 1983009808
        %v1110 = vunpack.c.0.s8 %v1109
        %v1111 = vperm.slane %v1105, %v1110
        %v1113 = vunpack.c.l.s4 1983009808
        %v1114 = vunpack.c.0.s8 %v1113
        %v1115 = vperm.slane %v1107, %v1114
        %v1116 = vrot.slane %v1111, 4
        %v1117 = vsel %vm840, %v1116, %v1099
        %v1118 = vrot.slane %v1099, 4
        %v1119 = vsel %vm840, %v1111, %v1118
        %v1121 = vunpack.c.l.s4 1934713408
        %v1122 = vunpack.c.0.s8 %v1121
        %v1123 = vperm.slane %v1117, %v1122
        %v1125 = vunpack.c.l.s4 1934713408
        %v1126 = vunpack.c.0.s8 %v1125
        %v1127 = vperm.slane %v1119, %v1126
        %v1128 = vrot.slane %v1115, 4
        %v1129 = vsel %vm840, %v1128, %v1103
        %v1130 = vrot.slane %v1103, 4
        %v1131 = vsel %vm840, %v1115, %v1130
        %v1133 = vunpack.c.l.s4 1934713408
        %v1134 = vunpack.c.0.s8 %v1133
        %v1135 = vperm.slane %v1129, %v1134
        %v1137 = vunpack.c.l.s4 1934713408
        %v1138 = vunpack.c.0.s8 %v1137
        %v1139 = vperm.slane %v1131, %v1138
        %v1140 = vrot.slane %v1123, 4
        %v1141 = vsel %vm840, 0.0, %v1140
        %v1142 = vrot.slane %v1127, 4
        %v1143 = vsel %vm840, 0.0, %v1142
        %v1144 = vrot.slane %v1135, 4
        %v1145 = vsel %vm840, 0.0, %v1144
        %v1146 = vrot.slane %v1139, 4
        %v1147 = vsel %vm840, 0.0, %v1146
        %v1148 = vsel %vm840, %v1142, %v1123
        %v1150 = vunpack.c.l.s4 1983009808
        %v1151 = vunpack.c.0.s8 %v1150
        %v1152 = vperm.slane %v1148, %v1151
        %v1153 = vrot.slane %v1143, 4
        %v1154 = vsel %vm840, %v1153, %v1141
        %v1156 = vunpack.c.l.s4 1983009808
        %v1157 = vunpack.c.0.s8 %v1156
        %v1158 = vperm.slane %v1154, %v1157
        %v1159 = vsel %vm840, %v1146, %v1135
        %v1161 = vunpack.c.l.s4 1983009808
        %v1162 = vunpack.c.0.s8 %v1161
        %v1163 = vperm.slane %v1159, %v1162
        %v1164 = vrot.slane %v1147, 4
        %v1165 = vsel %vm840, %v1164, %v1145
        %v1167 = vunpack.c.l.s4 1983009808
        %v1168 = vunpack.c.0.s8 %v1167
        %v1169 = vperm.slane %v1165, %v1168
        %v1170 = vrot.slane %v1158, 4
        %v1171 = vsel %vm840, %v1170, %v1152
        %v1172 = vrot.slane %v1152, 4
        %v1173 = vsel %vm840, %v1158, %v1172
        %v1175 = vunpack.c.l.s4 1934713408
        %v1176 = vunpack.c.0.s8 %v1175
        %v1177 = vperm.slane %v1171, %v1176
        %v1179 = vunpack.c.l.s4 1934713408
        %v1180 = vunpack.c.0.s8 %v1179
        %v1181 = vperm.slane %v1173, %v1180
        %v1182 = vrot.slane %v1169, 4
        %v1183 = vsel %vm840, %v1182, %v1163
        %v1184 = vrot.slane %v1163, 4
        %v1185 = vsel %vm840, %v1169, %v1184
        %v1187 = vunpack.c.l.s4 1934713408
        %v1188 = vunpack.c.0.s8 %v1187
        %v1189 = vperm.slane %v1183, %v1188
        %v1191 = vunpack.c.l.s4 1934713408
        %v1192 = vunpack.c.0.s8 %v1191
        %v1193 = vperm.slane %v1185, %v1192
        %v1194 = vrot.slane %v1189, 4
        %v1195 = vsel %vm840, %v1194, %v1177
        %v1196 = vrot.slane %v1177, 4
        %v1197 = vsel %vm840, %v1189, %v1196
        %v1198 = vrot.slane %v1193, 4
        %v1199 = vsel %vm840, %v1198, %v1181
        %v1200 = vrot.slane %v1181, 4
        %v1201 = vsel %vm840, %v1193, %v1200
        %v1202 = vpack.c.bf16 %v1195, %v1195
        %v1203 = vpack.c.bf16 %v1197, %v1197
        %v1204 = vpack.c.bf16 %v1199, %v1199
        %v1205 = vpack.c.bf16 %v1201, %v1201
        %v1207 = vperm.slane %v790, 0
        %vm1209 = vcmask 64512
        %v1211 = vsel %vm1209, %v950, 0
        %v1214 = vsel %vm1209, %v1076, 0
        %1216 = vmatpush.bf16.xpose.msra.mxu0 0
        %1217 = vmatpush.bf16.xpose.msra.mxu0 0
        %1218 = vmatpush.bf16.xpose.msra.mxu0 0
        %1219 = vmatpush.bf16.xpose.msra.mxu0 0
        %1220 = vmatpush.bf16.xpose.msra.mxu0 0
        %1221 = vmatpush.bf16.xpose.msra.mxu0 0
        %1222 = vmatpush.bf16.xpose.msra.mxu0 0
        %1223 = vmatpush.bf16.xpose.msra.mxu0 %v1214
        %1224 = vmatmul.bf16.gmra.mxu0 %v1211
        %v1225 = vpop.f32.mrf.mxu0
        %v1226 = vadd.f32 %v1207, %v1225
        %v1227 = vpop.f32.mrf.mxu0
        %1228 = vdwg.mxu0
        %v1230 = vsel %vm1209, %v951, 0
        %v1233 = vsel %vm1209, %v1077, 0
        %1235 = vmatpush.bf16.xpose.msra.mxu0 0
        %1236 = vmatpush.bf16.xpose.msra.mxu0 0
        %1237 = vmatpush.bf16.xpose.msra.mxu0 0
        %1238 = vmatpush.bf16.xpose.msra.mxu0 0
        %1239 = vmatpush.bf16.xpose.msra.mxu0 0
        %1240 = vmatpush.bf16.xpose.msra.mxu0 0
        %1241 = vmatpush.bf16.xpose.msra.mxu0 0
        %1242 = vmatpush.bf16.xpose.msra.mxu0 %v1233
        %1243 = vmatmul.bf16.gmra.mxu0 %v1230
        %v1244 = vpop.f32.mrf.mxu0
        %v1245 = vadd.f32 %v1207, %v1244
        %v1246 = vpop.f32.mrf.mxu0
        %1247 = vdwg.mxu0
        %v1249 = vsel %vm1209, %v952, 0
        %v1252 = vsel %vm1209, %v1078, 0
        %1254 = vmatpush.bf16.xpose.msra.mxu0 0
        %1255 = vmatpush.bf16.xpose.msra.mxu0 0
        %1256 = vmatpush.bf16.xpose.msra.mxu0 0
        %1257 = vmatpush.bf16.xpose.msra.mxu0 0
        %1258 = vmatpush.bf16.xpose.msra.mxu0 0
        %1259 = vmatpush.bf16.xpose.msra.mxu0 0
        %1260 = vmatpush.bf16.xpose.msra.mxu0 0
        %1261 = vmatpush.bf16.xpose.msra.mxu0 %v1252
        %1262 = vmatmul.bf16.gmra.mxu0 %v1249
        %v1263 = vpop.f32.mrf.mxu0
        %v1264 = vadd.f32 %v1207, %v1263
        %v1265 = vpop.f32.mrf.mxu0
        %1266 = vdwg.mxu0
        %v1268 = vsel %vm1209, %v953, 0
        %v1271 = vsel %vm1209, %v1079, 0
        %1273 = vmatpush.bf16.xpose.msra.mxu0 0
        %1274 = vmatpush.bf16.xpose.msra.mxu0 0
        %1275 = vmatpush.bf16.xpose.msra.mxu0 0
        %1276 = vmatpush.bf16.xpose.msra.mxu0 0
        %1277 = vmatpush.bf16.xpose.msra.mxu0 0
        %1278 = vmatpush.bf16.xpose.msra.mxu0 0
        %1279 = vmatpush.bf16.xpose.msra.mxu0 0
        %1280 = vmatpush.bf16.xpose.msra.mxu0 %v1271
        %1281 = vmatmul.bf16.gmra.mxu0 %v1268
        %v1282 = vpop.f32.mrf.mxu0
        %v1283 = vadd.f32 %v1207, %v1282
        %v1284 = vpop.f32.mrf.mxu0
        %1285 = vdwg.mxu0
        %v1286 = vsel %vm1209, %v1226, -inf
        %1287 = vmax.xlane.f32.xlu0 %v1286
        %v1288 = vpop.xlane.xlu0 %1287
        %v1289 = vsel %vm1209, %v1245, -inf
        %1290 = vmax.xlane.f32.xlu0 %v1289
        %v1291 = vpop.xlane.xlu0 %1290
        %v1292 = vsel %vm1209, %v1264, -inf
        %1293 = vmax.xlane.f32.xlu0 %v1292
        %v1294 = vpop.xlane.xlu0 %1293
        %v1295 = vsel %vm1209, %v1283, -inf
        %1296 = vmax.xlane.f32.xlu0 %v1295
        %v1297 = vpop.xlane.xlu0 %1296
        %v1298 = vsub.f32 %v1226, %v1288
        %v1299 = vsub.f32 %v1245, %v1291
        %v1300 = vsub.f32 %v1264, %v1294
        %v1301 = vsub.f32 %v1283, %v1297
        %v1302 = vmul.f32 %v1298, 1.442695
        %v1303 = vpow.pop %v1302
        %v1304 = vmul.f32 %v1299, 1.442695
        %v1305 = vpow.pop %v1304
        %v1306 = vmul.f32 %v1300, 1.442695
        %v1307 = vpow.pop %v1306
        %v1308 = vmul.f32 %v1301, 1.442695
        %v1309 = vpow.pop %v1308
        %v1310 = vsel %vm1209, %v1303, 0.0
        %1311 = vadd.xlane.f32.xlu0 %v1310
        %v1312 = vpop.xlane.xlu0 %1311
        %v1313 = vsel %vm1209, %v1305, 0.0
        %1314 = vadd.xlane.f32.xlu0 %v1313
        %v1315 = vpop.xlane.xlu0 %1314
        %v1316 = vsel %vm1209, %v1307, 0.0
        %1317 = vadd.xlane.f32.xlu0 %v1316
        %v1318 = vpop.xlane.xlu0 %1317
        %v1319 = vsel %vm1209, %v1309, 0.0
        %1320 = vadd.xlane.f32.xlu0 %v1319
        %v1321 = vpop.xlane.xlu0 %1320
        %v1322 = vpack.c.bf16 %v1303, %v1303
        %v1323 = vpack.c.bf16 %v1305, %v1305
        %v1324 = vpack.c.bf16 %v1307, %v1307
        %v1325 = vpack.c.bf16 %v1309, %v1309
        %v1327 = vsel %vm1209, %v1322, 0
        %vm1329 = vcmask 1043456
        %v1331 = vsel %vm1329, %v1202, 0
        %1333 = vmatpush.bf16.msra.mxu0 0
        %1334 = vmatpush.bf16.msra.mxu0 0
        %1335 = vmatpush.bf16.msra.mxu0 0
        %1336 = vmatpush.bf16.msra.mxu0 0
        %1337 = vmatpush.bf16.msra.mxu0 0
        %1338 = vmatpush.bf16.msra.mxu0 0
        %1339 = vmatpush.bf16.msra.mxu0 0
        %1340 = vmatpush.bf16.msra.mxu0 %v1331
        %1341 = vmatmul.bf16.gmra.mxu0 %v1327
        %v1342 = vpop.f32.mrf.mxu0
        %v1343 = vadd.f32 0.0, %v1342
        %v1344 = vpop.f32.mrf.mxu0
        %1345 = vdwg.mxu0
        %v1347 = vsel %vm1209, %v1323, 0
        %v1350 = vsel %vm1329, %v1203, 0
        %1352 = vmatpush.bf16.msra.mxu0 0
        %1353 = vmatpush.bf16.msra.mxu0 0
        %1354 = vmatpush.bf16.msra.mxu0 0
        %1355 = vmatpush.bf16.msra.mxu0 0
        %1356 = vmatpush.bf16.msra.mxu0 0
        %1357 = vmatpush.bf16.msra.mxu0 0
        %1358 = vmatpush.bf16.msra.mxu0 0
        %1359 = vmatpush.bf16.msra.mxu0 %v1350
        %1360 = vmatmul.bf16.gmra.mxu0 %v1347
        %v1361 = vpop.f32.mrf.mxu0
        %v1362 = vadd.f32 0.0, %v1361
        %v1363 = vpop.f32.mrf.mxu0
        %1364 = vdwg.mxu0
        %v1366 = vsel %vm1209, %v1324, 0
        %v1369 = vsel %vm1329, %v1204, 0
        %1371 = vmatpush.bf16.msra.mxu0 0
        %1372 = vmatpush.bf16.msra.mxu0 0
        %1373 = vmatpush.bf16.msra.mxu0 0
        %1374 = vmatpush.bf16.msra.mxu0 0
        %1375 = vmatpush.bf16.msra.mxu0 0
        %1376 = vmatpush.bf16.msra.mxu0 0
        %1377 = vmatpush.bf16.msra.mxu0 0
        %1378 = vmatpush.bf16.msra.mxu0 %v1369
        %1379 = vmatmul.bf16.gmra.mxu0 %v1366
        %v1380 = vpop.f32.mrf.mxu0
        %v1381 = vadd.f32 0.0, %v1380
        %v1382 = vpop.f32.mrf.mxu0
        %1383 = vdwg.mxu0
        %v1385 = vsel %vm1209, %v1325, 0
        %v1388 = vsel %vm1329, %v1205, 0
        %1390 = vmatpush.bf16.msra.mxu0 0
        %1391 = vmatpush.bf16.msra.mxu0 0
        %1392 = vmatpush.bf16.msra.mxu0 0
        %1393 = vmatpush.bf16.msra.mxu0 0
        %1394 = vmatpush.bf16.msra.mxu0 0
        %1395 = vmatpush.bf16.msra.mxu0 0
        %1396 = vmatpush.bf16.msra.mxu0 0
        %1397 = vmatpush.bf16.msra.mxu0 %v1388
        %1398 = vmatmul.bf16.gmra.mxu0 %v1385
        %v1399 = vpop.f32.mrf.mxu0
        %v1400 = vadd.f32 0.0, %v1399
        %v1401 = vpop.f32.mrf.mxu0
        %1402 = vdwg.mxu0
        %v1403 = vrcp.pop %v1312
        %v1404 = vrcp.pop %v1315
        %v1405 = vrcp.pop %v1318
        %v1406 = vrcp.pop %v1321
        %v1407 = vmul.f32 %v1343, %v1403
        %v1408 = vmul.f32 %v1362, %v1404
        %v1409 = vmul.f32 %v1381, %v1405
        %v1410 = vmul.f32 %v1400, %v1406
        %v1411 = vrot.slane %v1409, 4
        %v1412 = vsel %vm840, %v1411, %v1407
        %v1413 = vrot.slane %v1407, 4
        %v1414 = vsel %vm840, %v1409, %v1413
        %v1416 = vunpack.c.l.s4 1983009808
        %v1417 = vunpack.c.0.s8 %v1416
        %v1418 = vperm.slane %v1412, %v1417
        %v1420 = vunpack.c.l.s4 1983009808
        %v1421 = vunpack.c.0.s8 %v1420
        %v1422 = vperm.slane %v1414, %v1421
        %v1423 = vrot.slane %v1410, 4
        %v1424 = vsel %vm840, %v1423, %v1408
        %v1425 = vrot.slane %v1408, 4
        %v1426 = vsel %vm840, %v1410, %v1425
        %v1428 = vunpack.c.l.s4 1983009808
        %v1429 = vunpack.c.0.s8 %v1428
        %v1430 = vperm.slane %v1424, %v1429
        %v1432 = vunpack.c.l.s4 1983009808
        %v1433 = vunpack.c.0.s8 %v1432
        %v1434 = vperm.slane %v1426, %v1433
        %v1435 = vrot.slane %v1430, 4
        %v1436 = vsel %vm840, %v1435, %v1418
        %v1437 = vrot.slane %v1418, 4
        %v1438 = vsel %vm840, %v1430, %v1437
        %v1440 = vunpack.c.l.s4 1934713408
        %v1441 = vunpack.c.0.s8 %v1440
        %v1442 = vperm.slane %v1436, %v1441
        %v1444 = vunpack.c.l.s4 1934713408
        %v1445 = vunpack.c.0.s8 %v1444
        %v1446 = vperm.slane %v1438, %v1445
        %v1447 = vrot.slane %v1434, 4
        %v1448 = vsel %vm840, %v1447, %v1422
        %v1449 = vrot.slane %v1422, 4
        %v1450 = vsel %vm840, %v1434, %v1449
        %v1452 = vunpack.c.l.s4 1934713408
        %v1453 = vunpack.c.0.s8 %v1452
        %v1454 = vperm.slane %v1448, %v1453
        %v1456 = vunpack.c.l.s4 1934713408
        %v1457 = vunpack.c.0.s8 %v1456
        %v1458 = vperm.slane %v1450, %v1457
        %v1459 = vrot.slane %v1442, 4
        %v1460 = vsel %vm840, 0.0, %v1459
        %v1461 = vrot.slane %v1446, 4
        %v1462 = vsel %vm840, 0.0, %v1461
        %v1463 = vrot.slane %v1454, 4
        %v1464 = vsel %vm840, 0.0, %v1463
        %v1465 = vrot.slane %v1458, 4
        %v1466 = vsel %vm840, 0.0, %v1465
        %v1467 = vsel %vm840, %v1461, %v1442
        %v1469 = vunpack.c.l.s4 1983009808
        %v1470 = vunpack.c.0.s8 %v1469
        %v1471 = vperm.slane %v1467, %v1470
        %v1472 = vrot.slane %v1462, 4
        %v1473 = vsel %vm840, %v1472, %v1460
        %v1475 = vunpack.c.l.s4 1983009808
        %v1476 = vunpack.c.0.s8 %v1475
        %v1477 = vperm.slane %v1473, %v1476
        %v1478 = vsel %vm840, %v1465, %v1454
        %v1480 = vunpack.c.l.s4 1983009808
        %v1481 = vunpack.c.0.s8 %v1480
        %v1482 = vperm.slane %v1478, %v1481
        %v1483 = vrot.slane %v1466, 4
        %v1484 = vsel %vm840, %v1483, %v1464
        %v1486 = vunpack.c.l.s4 1983009808
        %v1487 = vunpack.c.0.s8 %v1486
        %v1488 = vperm.slane %v1484, %v1487
        %v1489 = vrot.slane %v1477, 4
        %v1490 = vsel %vm840, %v1489, %v1471
        %v1491 = vrot.slane %v1471, 4
        %v1492 = vsel %vm840, %v1477, %v1491
        %v1494 = vunpack.c.l.s4 1934713408
        %v1495 = vunpack.c.0.s8 %v1494
        %v1496 = vperm.slane %v1490, %v1495
        %v1498 = vunpack.c.l.s4 1934713408
        %v1499 = vunpack.c.0.s8 %v1498
        %v1500 = vperm.slane %v1492, %v1499
        %v1501 = vrot.slane %v1488, 4
        %v1502 = vsel %vm840, %v1501, %v1482
        %v1503 = vrot.slane %v1482, 4
        %v1504 = vsel %vm840, %v1488, %v1503
        %v1506 = vunpack.c.l.s4 1934713408
        %v1507 = vunpack.c.0.s8 %v1506
        %v1508 = vperm.slane %v1502, %v1507
        %v1510 = vunpack.c.l.s4 1934713408
        %v1511 = vunpack.c.0.s8 %v1510
        %v1512 = vperm.slane %v1504, %v1511
        %v1513 = vrot.slane %v1508, 4
        %v1514 = vsel %vm840, %v1513, %v1496
        %v1515 = vrot.slane %v1496, 4
        %v1516 = vsel %vm840, %v1508, %v1515
        %v1517 = vrot.slane %v1512, 4
        %v1518 = vsel %vm840, %v1517, %v1500
        %v1519 = vrot.slane %v1500, 4
        %v1520 = vsel %vm840, %v1512, %v1519
        %1522 = vrot.lane.b32.xlu0 %v1516, 8
        %v1523 = vpop.permute.xlu0 %1522
        %1526 = vrot.lane.b32.xlu0 %v1518, 16
        %v1527 = vpop.permute.xlu0 %1526
        %1530 = vrot.lane.b32.xlu0 %v1520, 24
        %v1531 = vpop.permute.xlu0 %1530
        %v1533 = vsel %vm1209, %v1514, %v1523
        %vm1534 = vcmask 130048
        %v1535 = vsel %vm1534, %v1533, %v1527
        %vm1536 = vcmask 195584
        %v1537 = vsel %vm1536, %v1535, %v1531
        %v1538 = vpack.c.bf16 %v1537, %v1537
        %v1539 = vld [vmem:[%s755] sm:$0xf]
        %v1540 = vld [vmem:[%s755 + $0x4] sm:$0xf]
        %v1541 = vld [vmem:[%s755 + $0x8] sm:$0xf]
        %v1542 = vld [vmem:[%s755 + $0xc] sm:$0xf]
        %v1543 = vld [vmem:[%s758] sm:$0x1]
        %v1545 = vperm.slane %v1543, 0
        %v1551 = vunpack.c.l.b16 %v1539
        %v1552 = vunpack.c.l.b16 %v1540
        %v1553 = vunpack.c.l.b16 %v1541
        %v1554 = vunpack.c.l.b16 %v1542
        %v1555 = vpack.c.b16 %v1552, %v1551
        %v1556 = vpack.c.b16 %v1554, %v1553
        %v1560 = vsel %vm812, %v1538, 0
        %1562 = vmatpush.bf16.msra.mxu0 0
        %1563 = vmatpush.bf16.msra.mxu0 0
        %1564 = vmatpush.bf16.msra.mxu0 0
        %1565 = vmatpush.bf16.msra.mxu0 0
        %1566 = vmatpush.bf16.msra.mxu0 0
        %1567 = vmatpush.bf16.msra.mxu0 0
        %1568 = vmatpush.bf16.msra.mxu0 %v1556
        %1569 = vmatpush.bf16.msra.mxu0 %v1555
        %1570 = vmatmul.bf16.gmra.mxu0 %v1560
        %v1571 = vpop.f32.mrf.mxu0
        %v1572 = vadd.f32 %v1545, %v1571
        %v1573 = vpop.f32.mrf.mxu0
        %1574 = vdwg.mxu0
        %v1575 = vadd.f32 %v789, %v1572
        %v1576 = vld [vmem:[%s761] sm:$0x1]
        %v1577 = vld [vmem:[%s640] sm:$0x1]
        %v1578 = vsel %vm812, %v1575, 0.0
        %1579 = vadd.xlane.f32.xlu0 %v1578
        %v1580 = vpop.xlane.xlu0 %1579
        %v1581 = vrcp.pop 32.0
        %v1582 = vmul.f32 32.0, %v1581
        %v1583 = vsub.f32 1.0, %v1582
        %v1584 = vmul.f32 %v1581, %v1583
        %v1585 = vadd.f32 %v1581, %v1584
        %vm1586 = vweird.f32 %v1581
        %v1587 = vsel %vm1586, %v1581, %v1585
        %v1588 = vmul.f32 %v1580, %v1587
        %v1589 = vsub.f32 %v1575, %v1588
        %v1590 = vmul.f32 %v1589, %v1589
        %v1591 = vsel %vm812, %v1590, 0.0
        %1592 = vadd.xlane.f32.xlu0 %v1591
        %v1593 = vpop.xlane.xlu0 %1592
        %v1594 = vmul.f32 %v1593, %v1587
        %v1595 = vadd.f32 %v1594, 1e-05
        %v1596 = vrsqrt.pop %v1595
        %v1597 = vmul.f32 %v1596, %v1595
        %v1598 = vmul.f32 %v1597, %v1596
        %v1599 = vmul.f32 0.5, %v1598
        %v1600 = vsub.f32 1.5, %v1599
        %v1601 = vmul.f32 %v1596, %v1600
        %vm1602 = vweird.f32 %v1595
        %vm1603 = vweird.f32 %v1596
        %vm1604 = vmor %vm1602, %vm1603
        %v1605 = vsel %vm1604, %v1596, %v1601
        %v1606 = vmul.f32 %v1589, %v1605
        %v1608 = vperm.slane %v1576, 0
        %v1610 = vmul.f32 %v1606, %v1608
        %v1612 = vperm.slane %v1577, 0
        %v1614 = vadd.f32 %v1610, %v1612
        %v1615 = vpack.c.bf16 %v1614, %v1614
        %v1616 = vld [vmem:[%s766] sm:$0xf]
        %v1617 = vld [vmem:[%s766 + $0x4] sm:$0xf]
        %v1618 = vld [vmem:[%s766 + $0x8] sm:$0xf]
        %v1619 = vld [vmem:[%s766 + $0xc] sm:$0xf]
        %v1620 = vld [vmem:[%s769] sm:$0x1]
        %v1622 = vperm.slane %v1620, 0
        %v1628 = vunpack.c.l.b16 %v1616
        %v1629 = vunpack.c.l.b16 %v1617
        %v1630 = vunpack.c.l.b16 %v1618
        %v1631 = vunpack.c.l.b16 %v1619
        %v1632 = vpack.c.b16 %v1629, %v1628
        %v1633 = vpack.c.b16 %v1631, %v1630
        %v1637 = vsel %vm812, %v1615, 0
        %1639 = vmatpush.bf16.msra.mxu0 0
        %1640 = vmatpush.bf16.msra.mxu0 0
        %1641 = vmatpush.bf16.msra.mxu0 0
        %1642 = vmatpush.bf16.msra.mxu0 0
        %1643 = vmatpush.bf16.msra.mxu0 0
        %1644 = vmatpush.bf16.msra.mxu0 0
        %1645 = vmatpush.bf16.msra.mxu0 %v1633
        %1646 = vmatpush.bf16.msra.mxu0 %v1632
        %1647 = vmatmul.bf16.gmra.mxu0 %v1637
        %v1648 = vpop.f32.mrf.mxu0
        %v1649 = vadd.f32 %v1622, %v1648
        %v1650 = vpop.f32.mrf.mxu0
        %1651 = vdwg.mxu0
        %v1652 = vmul.f32 %v1649, %v1649
        %v1653 = vmul.f32 %v1649, %v1652
        %v1654 = vmul.f32 %v1653, 0.044715
        %v1655 = vadd.f32 %v1649, %v1654
        %v1656 = vmul.f32 %v1655, 0.7978846
        %v1657 = vtanh.pop %v1656
        %v1658 = vadd.f32 %v1657, 1.0
        %v1659 = vmul.f32 %v1658, 0.5
        %v1660 = vmul.f32 %v1649, %v1659
        %v1661 = vpack.c.bf16 %v1660, %v1660
        %v1662 = vld [vmem:[%s774] sm:$0xf]
        %v1663 = vld [vmem:[%s774 + $0x4] sm:$0xf]
        %v1664 = vld [vmem:[%s774 + $0x8] sm:$0xf]
        %v1665 = vld [vmem:[%s774 + $0xc] sm:$0xf]
        %v1666 = vld [vmem:[%s774 + $0x10] sm:$0xf]
        %v1667 = vld [vmem:[%s774 + $0x14] sm:$0xf]
        %v1668 = vld [vmem:[%s774 + $0x18] sm:$0xf]
        %v1669 = vld [vmem:[%s774 + $0x1c] sm:$0xf]
        %v1670 = vld [vmem:[%s777] sm:$0x1]
        %v1672 = vperm.slane %v1670, 0
        %v1682 = vunpack.c.l.b16 %v1662
        %v1683 = vunpack.c.l.b16 %v1663
        %v1684 = vunpack.c.l.b16 %v1664
        %v1685 = vunpack.c.l.b16 %v1665
        %v1686 = vunpack.c.l.b16 %v1666
        %v1687 = vunpack.c.l.b16 %v1667
        %v1688 = vunpack.c.l.b16 %v1668
        %v1689 = vunpack.c.l.b16 %v1669
        %v1690 = vpack.c.b16 %v1683, %v1682
        %v1691 = vpack.c.b16 %v1685, %v1684
        %v1692 = vpack.c.b16 %v1687, %v1686
        %v1693 = vpack.c.b16 %v1689, %v1688
        %vm1698 = vcmask 523264
        %v1700 = vsel %vm1698, %v1661, 0
        %1702 = vmatpush.bf16.msra.mxu0 0
        %1703 = vmatpush.bf16.msra.mxu0 0
        %1704 = vmatpush.bf16.msra.mxu0 0
        %1705 = vmatpush.bf16.msra.mxu0 0
        %1706 = vmatpush.bf16.msra.mxu0 %v1693
        %1707 = vmatpush.bf16.msra.mxu0 %v1692
        %1708 = vmatpush.bf16.msra.mxu0 %v1691
        %1709 = vmatpush.bf16.msra.mxu0 %v1690
        %1710 = vmatmul.bf16.gmra.mxu0 %v1700
        %v1711 = vpop.f32.mrf.mxu0
        %v1712 = vadd.f32 %v1672, %v1711
        %v1713 = vpop.f32.mrf.mxu0
        %1714 = vdwg.mxu0
        %v1715 = vadd.f32 %v1614, %v1712
        %v1716 = vld [vmem:[%s780] sm:$0x1]
        %v1717 = vld [vmem:[%s649] sm:$0x1]
        %v1718 = vsel %vm812, %v1715, 0.0
        %1719 = vadd.xlane.f32.xlu0 %v1718
        %v1720 = vpop.xlane.xlu0 %1719
        %v1721 = vmul.f32 %v1720, %v1587
        %v1722 = vsub.f32 %v1715, %v1721
        %v1723 = vmul.f32 %v1722, %v1722
        %v1724 = vsel %vm812, %v1723, 0.0
        %1725 = vadd.xlane.f32.xlu0 %v1724
        %v1726 = vpop.xlane.xlu0 %1725
        %v1727 = vmul.f32 %v1726, %v1587
        %v1728 = vadd.f32 %v1727, 1e-05
        %v1729 = vrsqrt.pop %v1728
        %v1730 = vmul.f32 %v1729, %v1728
        %v1731 = vmul.f32 %v1730, %v1729
        %v1732 = vmul.f32 0.5, %v1731
        %v1733 = vsub.f32 1.5, %v1732
        %v1734 = vmul.f32 %v1729, %v1733
        %vm1735 = vweird.f32 %v1728
        %vm1736 = vweird.f32 %v1729
        %vm1737 = vmor %vm1735, %vm1736
        %v1738 = vsel %vm1737, %v1729, %v1734
        %v1739 = vmul.f32 %v1722, %v1738
        %v1741 = vperm.slane %v1716, 0
        %v1743 = vmul.f32 %v1739, %v1741
        %v1745 = vperm.slane %v1717, 0
        %v1747 = vadd.f32 %v1743, %v1745
        %1748 = vst.msk [vmem:[%s745] sm:$0xff] %vm812, %v1747
        %s1749 = sand.u32 %s421, 1
        %s1750 = scalar_lea.sflag [#allocation4], %s1749
        %s1751 = sand.u32 %s421, 1
        %s1752 = smul.addr %s1751, 8
        %s1753 = scalar_lea.vmem [#allocation11], %s1752
        // Predicated region
        $region101: #{tpu_custom_call.1} parent=75 // pred_check
          %p1754 = pneg %p431
        $region102: #{tpu_custom_call.1} parent=75 // pred_check_branch
          %1756 = sbr.rel (%p1754) target = $region104
        $region103: #{tpu_custom_call.1} parent=75 // pred_region
          %1758 = vsyncadd %s1750, 0
          %s1759 = smul.addr %s41, 8
          %s1760 = scalar_lea.hbm %s14, %s1759
          %s1762 = sshll.u32 %s1753, 4
          %s1763 = int_to_ptr.vmem [resolvable:$true] %s1762
          %s1764 = sshll.u32 %s1760, 4
          %s1765 = int_to_ptr.hbm [resolvable:$true] %s1764
          %1767 = dma.vmem_to_hbm [thread:$0]  %s1763, 128, %s1765, %s1750
        $region104: #{tpu_custom_call.1} parent=75 // pred_fallthru
          _
      $region76: #{tpu_custom_call.1} parent=5 // pred_fallthru
        _
      %p1768 = scmp.le.s32.totalorder 2, %s32
      // Predicated region
      $region105: #{tpu_custom_call.1} parent=5 // pred_check
        %p1769 = pneg %p1768
      $region106: #{tpu_custom_call.1} parent=5 // pred_check_branch
        %1771 = sbr.rel (%p1769) target = $region108
      $region107: #{tpu_custom_call.1} parent=5 // pred_region
        %s1772 = ssub.s32 %s32, 2
        // Predicated region
        $region109: #{tpu_custom_call.1} parent=107 // pred_check
          %p1773 = pneg %p437
        $region110: #{tpu_custom_call.1} parent=107 // pred_check_branch
          %1775 = sbr.rel (%p1773) target = $region112
        $region111: #{tpu_custom_call.1} parent=107 // pred_region
          %s1776 = sand.u32 %s422, 1
          %s1777 = scalar_lea.sflag [#allocation4], %s1776
          %s1778 = sand.u32 %s422, 1
          %s1779 = smul.addr %s1778, 8
          %s1780 = scalar_lea.vmem [#allocation11], %s1779
          %1782 = dma.done %s1777, 128
        $region112: #{tpu_custom_call.1} parent=107 // pred_fallthru
          _
      $region108: #{tpu_custom_call.1} parent=5 // pred_fallthru
        _
    $region6: #{tpu_custom_call.1} parent=1 // loop_footer
      %s36 = sadd.s32 1, %s32
    $region7: #{tpu_custom_call.1} parent=1 // loop_footer_branch
      %31 = sbr.rel target = $region3
    $region8: #{tpu_custom_call.1} parent=1 // loop_exit
      _
    %1783 = vsyncpa [#allocation3], 1
    %s1784 = scalar_lea.sflag [#allocation3], 1
    %1785 = vsyncpa %s1784, 1
    %1786 = vsyncpa [#allocation6], 1
    %s1787 = scalar_lea.sflag [#allocation6], 1
    %1788 = vsyncpa %s1787, 1
    %1789 = vsyncpa [#allocation9], 1
    %s1790 = scalar_lea.sflag [#allocation9], 1
    %1791 = vsyncpa %s1790, 1
    %1792 = vsyncpa [#allocation4], 1
    %s1793 = scalar_lea.sflag [#allocation4], 1
    %1794 = vsyncpa %s1793, 1

</llo_original>
